<compile_context>
chip_gen: v7x
topology: tpu7x:2x2x1
jax: 0.10.0
libtpu: 0.0.40
codegen_flags: <defaults>
</compile_context>

<pallas_src>
import functools

import jax
import jax.numpy as jnp
from jax.experimental import pallas as pl
from jax.experimental.pallas import tpu as pltpu


def _coupling_kernel(x_ref, w1_ref, b1_ref, w2s_ref, b2s_ref, w2l_ref, b2l_ref,
                     o_ref, *, d, reverse):
    """out = [x1 | x2*exp(ls)+sh]  (halves swapped when reverse=True), where
    [sh | ls] = Linear2(ReLU(Linear1(x1)))."""
    x = x_ref[...]                                   # (TB, 2D) f32
    if not reverse:
        x1 = x[:, :d]
        x2 = x[:, d:]
    else:
        x2 = x[:, :d]
        x1 = x[:, d:]

    # Linear 1 + ReLU: bf16 MXU inputs, f32 accumulation, f32 epilogue.
    h = jnp.dot(x1.astype(jnp.bfloat16), w1_ref[...],
                preferred_element_type=jnp.float32)
    h = jnp.maximum(h + b1_ref[...], 0.0)            # (TB, H) f32

    # Linear 2, pre-split into shift / log_scale columns (no in-kernel slice
    # of the matmul result).
    hb = h.astype(jnp.bfloat16)
    shift = jnp.dot(hb, w2s_ref[...], preferred_element_type=jnp.float32)
    shift = shift + b2s_ref[...]                     # (TB, D) f32
    log_scale = jnp.dot(hb, w2l_ref[...], preferred_element_type=jnp.float32)
    log_scale = log_scale + b2l_ref[...]             # (TB, D) f32

    y2 = (x2 * jnp.exp(log_scale) + shift).astype(o_ref.dtype)
    x1_out = x1.astype(o_ref.dtype)

    # Fused concat: both halves are full-lane tiles when D % 128 == 0.
    if not reverse:
        o_ref[:, :d] = x1_out
        o_ref[:, d:] = y2
    else:
        o_ref[:, :d] = y2
        o_ref[:, d:] = x1_out


def _pick_batch_tile(batch):
    # Largest batch tile (multiple of 8, VMEM-safe even on v7x's 64 MiB) that
    # divides the batch; fall back to a full-array block otherwise.
    for tb in (1024, 512, 256, 128, 64, 32, 16, 8):
        if batch % tb == 0:
            return tb
    return batch  # block == full array dims (always a valid block shape)


def affine_coupling_forward(x, params, reverse=False):
    """Matches AffineCouplingLayer.forward semantics."""
    w1, b1, w2, b2 = params
    B, input_dim = x.shape
    D = input_dim // 2
    H = w1.shape[1]

    # Wrapper-level split of the second linear into shift / log_scale halves.
    w2s, w2l = w2[:, :D], w2[:, D:]
    b2s, b2l = b2[:D], b2[D:]

    # bf16 weights (MXU rate + half the weight DMA); biases stay f32.
    w1_b = w1.astype(jnp.bfloat16)
    w2s_b = w2s.astype(jnp.bfloat16)
    w2l_b = w2l.astype(jnp.bfloat16)
    b1_2d = b1.reshape(1, H).astype(jnp.float32)
    b2s_2d = b2s.reshape(1, D).astype(jnp.float32)
    b2l_2d = b2l.reshape(1, D).astype(jnp.float32)

    TB = _pick_batch_tile(B)
    grid = (B // TB,)

    kernel = functools.partial(_coupling_kernel, d=D, reverse=bool(reverse))

    return pl.pallas_call(
        kernel,
        out_shape=jax.ShapeDtypeStruct((B, input_dim), x.dtype),
        grid=grid,
        in_specs=[
            pl.BlockSpec((TB, input_dim), lambda i: (i, 0)),  # x (batch-tiled)
            pl.BlockSpec((D, H), lambda i: (0, 0)),           # W1 (resident, bf16)
            pl.BlockSpec((1, H), lambda i: (0, 0)),           # b1
            pl.BlockSpec((H, D), lambda i: (0, 0)),           # W2_shift (bf16)
            pl.BlockSpec((1, D), lambda i: (0, 0)),           # b2_shift
            pl.BlockSpec((H, D), lambda i: (0, 0)),           # W2_logscale (bf16)
            pl.BlockSpec((1, D), lambda i: (0, 0)),           # b2_logscale
        ],
        out_specs=pl.BlockSpec((TB, input_dim), lambda i: (i, 0)),
        compiler_params=pltpu.CompilerParams(
            dimension_semantics=("parallel",)),
    )(x, w1_b, b1_2d, w2s_b, b2s_2d, w2l_b, b2l_2d)


def init_params(key, input_dim, hidden_dim):
    """Deterministic init mimicking nn.Linear default (uniform +-1/sqrt(fan_in))."""
    D = input_dim // 2
    k1, k2, k3, k4 = jax.random.split(key, 4)
    lim1 = 1.0 / jnp.sqrt(D)
    lim2 = 1.0 / jnp.sqrt(hidden_dim)
    # Stored as (in, out) so the kernel does x @ W (equivalent to x @ W_torch.T).
    w1 = jax.random.uniform(k1, (D, hidden_dim), jnp.float32, -lim1, lim1)
    b1 = jax.random.uniform(k2, (hidden_dim,), jnp.float32, -lim1, lim1)
    w2 = jax.random.uniform(k3, (hidden_dim, 2 * D), jnp.float32, -lim2, lim2)
    b2 = jax.random.uniform(k4, (2 * D,), jnp.float32, -lim2, lim2)
    return (w1, b1, w2, b2)


def _reference_forward(x, params, reverse=False):
    """Pure-JAX reference with the same bf16-input / f32-accumulate matmuls."""
    w1, b1, w2, b2 = params
    D = x.shape[1] // 2
    first, second = x[:, :D], x[:, D:]
    x1, x2 = (first, second) if not reverse else (second, first)
    h = jnp.dot(x1.astype(jnp.bfloat16), w1.astype(jnp.bfloat16),
                preferred_element_type=jnp.float32) + b1
    h = jnp.maximum(h, 0.0)
    st = jnp.dot(h.astype(jnp.bfloat16), w2.astype(jnp.bfloat16),
                 preferred_element_type=jnp.float32) + b2
    shift, log_scale = st[:, :D], st[:, D:]
    y2 = x2 * jnp.exp(log_scale) + shift
    return jnp.concatenate([x1, y2] if not reverse else [y2, x1], axis=1)


if __name__ == "__main__":
    B = 128             # small demo batch; tiles to TB=128 (multiple of 8)
    INPUT_DIM = 256     # -> D = 128 (lane-aligned halves)
    HIDDEN_DIM = 512    # module default

    key = jax.random.PRNGKey(0)
    kx, kp = jax.random.split(key)
    x = jax.random.normal(kx, (B, INPUT_DIM), dtype=jnp.float32)
    params = init_params(kp, INPUT_DIM, HIDDEN_DIM)

    fwd = jax.jit(functools.partial(affine_coupling_forward, reverse=False))
    rev = jax.jit(functools.partial(affine_coupling_forward, reverse=True))

    out_fwd = fwd(x, params)
    out_rev = rev(x, params)
    jax.block_until_ready((out_fwd, out_rev))

    ref_fwd = _reference_forward(x, params, reverse=False)
    ref_rev = _reference_forward(x, params, reverse=True)
    assert out_fwd.shape == (B, INPUT_DIM)
    assert jnp.allclose(out_fwd, ref_fwd, atol=1e-2, rtol=1e-2), \
        float(jnp.max(jnp.abs(out_fwd - ref_fwd)))
    assert jnp.allclose(out_rev, ref_rev, atol=1e-2, rtol=1e-2), \
        float(jnp.max(jnp.abs(out_rev - ref_rev)))

    print("KERNEL_OK")
</pallas_src>

<mosaic_0001>
module attributes {stable_mosaic.version = 11 : i64} {
  func.func @_coupling_kernel(%arg0: i32, %arg1: memref<128x256xf32, #tpu.memory_space<vmem>>, %arg2: memref<128x512xbf16, #tpu.memory_space<vmem>>, %arg3: memref<1x512xf32, #tpu.memory_space<vmem>>, %arg4: memref<512x128xbf16, #tpu.memory_space<vmem>>, %arg5: memref<1x128xf32, #tpu.memory_space<vmem>>, %arg6: memref<512x128xbf16, #tpu.memory_space<vmem>>, %arg7: memref<1x128xf32, #tpu.memory_space<vmem>>, %arg8: memref<128x256xf32, #tpu.memory_space<vmem>>) attributes {dimension_semantics = [#tpu.dimension_semantics<parallel>], iteration_bounds = array<i64: 1>, scalar_prefetch = 0 : i64, scratch_operands = 0 : i64, tpu.core_type = #tpu.core_type<tc>, window_params = [{transform_indices = @transform_0, window_bounds = array<i64: 128, 256>}, {pipeline_mode = #tpu.pipeline_mode<synchronous>, transform_indices = @transform_1, window_bounds = array<i64: 128, 512>}, {pipeline_mode = #tpu.pipeline_mode<synchronous>, transform_indices = @transform_2, window_bounds = array<i64: 1, 512>}, {pipeline_mode = #tpu.pipeline_mode<synchronous>, transform_indices = @transform_3, window_bounds = array<i64: 512, 128>}, {pipeline_mode = #tpu.pipeline_mode<synchronous>, transform_indices = @transform_4, window_bounds = array<i64: 1, 128>}, {pipeline_mode = #tpu.pipeline_mode<synchronous>, transform_indices = @transform_5, window_bounds = array<i64: 512, 128>}, {pipeline_mode = #tpu.pipeline_mode<synchronous>, transform_indices = @transform_6, window_bounds = array<i64: 1, 128>}, {transform_indices = @transform_7, window_bounds = array<i64: 128, 256>}]} {
    %c0 = arith.constant 0 : index
    %c0_0 = arith.constant 0 : index
    %0 = vector.load %arg1[%c0, %c0_0] : memref<128x256xf32, #tpu.memory_space<vmem>>, vector<128x256xf32>
    %1 = vector.extract_strided_slice %0 {offsets = [0, 0], sizes = [128, 128], strides = [1, 1]} : vector<128x256xf32> to vector<128x128xf32>
    %2 = vector.extract_strided_slice %0 {offsets = [0, 128], sizes = [128, 128], strides = [1, 1]} : vector<128x256xf32> to vector<128x128xf32>
    %3 = arith.truncf %1 : vector<128x128xf32> to vector<128x128xbf16>
    %c0_1 = arith.constant 0 : index
    %c0_2 = arith.constant 0 : index
    %4 = vector.load %arg2[%c0_1, %c0_2] : memref<128x512xbf16, #tpu.memory_space<vmem>>, vector<128x512xbf16>
    %cst = arith.constant dense<0.000000e+00> : vector<128x512xf32>
    %5 = tpu.matmul %3, %4, %cst {dimension_numbers = #tpu.dot_dimension_numbers<[1], [0], [0], [1], [0, 0, 1, 1], [], []>} : vector<128x128xbf16>, vector<128x512xbf16>, vector<128x512xf32> -> vector<128x512xf32>
    %c0_3 = arith.constant 0 : index
    %c0_4 = arith.constant 0 : index
    %6 = vector.load %arg3[%c0_3, %c0_4] : memref<1x512xf32, #tpu.memory_space<vmem>>, vector<1x512xf32>
    %7 = vector.broadcast %6 : vector<1x512xf32> to vector<128x512xf32>
    %8 = arith.addf %5, %7 : vector<128x512xf32>
    %cst_5 = arith.constant 0.000000e+00 : f32
    %9 = vector.broadcast %cst_5 : f32 to vector<128x512xf32>
    %10 = arith.maximumf %8, %9 : vector<128x512xf32>
    %11 = arith.truncf %10 : vector<128x512xf32> to vector<128x512xbf16>
    %c0_6 = arith.constant 0 : index
    %c0_7 = arith.constant 0 : index
    %12 = vector.load %arg4[%c0_6, %c0_7] : memref<512x128xbf16, #tpu.memory_space<vmem>>, vector<512x128xbf16>
    %cst_8 = arith.constant dense<0.000000e+00> : vector<128x128xf32>
    %13 = tpu.matmul %11, %12, %cst_8 {dimension_numbers = #tpu.dot_dimension_numbers<[1], [0], [0], [1], [0, 0, 1, 1], [], []>} : vector<128x512xbf16>, vector<512x128xbf16>, vector<128x128xf32> -> vector<128x128xf32>
    %c0_9 = arith.constant 0 : index
    %c0_10 = arith.constant 0 : index
    %14 = vector.load %arg5[%c0_9, %c0_10] : memref<1x128xf32, #tpu.memory_space<vmem>>, vector<1x128xf32>
    %15 = vector.broadcast %14 : vector<1x128xf32> to vector<128x128xf32>
    %16 = arith.addf %13, %15 : vector<128x128xf32>
    %c0_11 = arith.constant 0 : index
    %c0_12 = arith.constant 0 : index
    %17 = vector.load %arg6[%c0_11, %c0_12] : memref<512x128xbf16, #tpu.memory_space<vmem>>, vector<512x128xbf16>
    %cst_13 = arith.constant dense<0.000000e+00> : vector<128x128xf32>
    %18 = tpu.matmul %11, %17, %cst_13 {dimension_numbers = #tpu.dot_dimension_numbers<[1], [0], [0], [1], [0, 0, 1, 1], [], []>} : vector<128x512xbf16>, vector<512x128xbf16>, vector<128x128xf32> -> vector<128x128xf32>
    %c0_14 = arith.constant 0 : index
    %c0_15 = arith.constant 0 : index
    %19 = vector.load %arg7[%c0_14, %c0_15] : memref<1x128xf32, #tpu.memory_space<vmem>>, vector<1x128xf32>
    %20 = vector.broadcast %19 : vector<1x128xf32> to vector<128x128xf32>
    %21 = arith.addf %18, %20 : vector<128x128xf32>
    %22 = math.exp %21 : vector<128x128xf32>
    %23 = arith.mulf %2, %22 : vector<128x128xf32>
    %24 = arith.addf %23, %16 : vector<128x128xf32>
    %c0_16 = arith.constant 0 : index
    %c0_17 = arith.constant 0 : index
    %25 = vector.load %arg8[%c0_16, %c0_17] : memref<128x256xf32, #tpu.memory_space<vmem>>, vector<128x128xf32>
    tpu.vector_store %arg8[%c0_16, %c0_17], %1 {strides = array<i32>} : memref<128x256xf32, #tpu.memory_space<vmem>>, vector<128x128xf32>,
    %c0_18 = arith.constant 0 : index
    %c128 = arith.constant 128 : index
    %26 = vector.load %arg8[%c0_18, %c128] : memref<128x256xf32, #tpu.memory_space<vmem>>, vector<128x128xf32>
    tpu.vector_store %arg8[%c0_18, %c128], %24 {strides = array<i32>} : memref<128x256xf32, #tpu.memory_space<vmem>>, vector<128x128xf32>,
    return
  }
  func.func @transform_0(%arg0: i32) -> (i32, i32) {
    %c0_i32 = arith.constant 0 : i32
    %c0_i32_0 = arith.constant 0 : i32
    return %arg0, %c0_i32 : i32, i32
  }
  func.func @transform_1(%arg0: i32) -> (i32, i32) {
    %c0_i32 = arith.constant 0 : i32
    %c0_i32_0 = arith.constant 0 : i32
    %c0_i32_1 = arith.constant 0 : i32
    return %c0_i32, %c0_i32_0 : i32, i32
  }
  func.func @transform_2(%arg0: i32) -> (i32, i32) {
    %c0_i32 = arith.constant 0 : i32
    %c0_i32_0 = arith.constant 0 : i32
    %c0_i32_1 = arith.constant 0 : i32
    return %c0_i32, %c0_i32_0 : i32, i32
  }
  func.func @transform_3(%arg0: i32) -> (i32, i32) {
    %c0_i32 = arith.constant 0 : i32
    %c0_i32_0 = arith.constant 0 : i32
    %c0_i32_1 = arith.constant 0 : i32
    return %c0_i32, %c0_i32_0 : i32, i32
  }
  func.func @transform_4(%arg0: i32) -> (i32, i32) {
    %c0_i32 = arith.constant 0 : i32
    %c0_i32_0 = arith.constant 0 : i32
    %c0_i32_1 = arith.constant 0 : i32
    return %c0_i32, %c0_i32_0 : i32, i32
  }
  func.func @transform_5(%arg0: i32) -> (i32, i32) {
    %c0_i32 = arith.constant 0 : i32
    %c0_i32_0 = arith.constant 0 : i32
    %c0_i32_1 = arith.constant 0 : i32
    return %c0_i32, %c0_i32_0 : i32, i32
  }
  func.func @transform_6(%arg0: i32) -> (i32, i32) {
    %c0_i32 = arith.constant 0 : i32
    %c0_i32_0 = arith.constant 0 : i32
    %c0_i32_1 = arith.constant 0 : i32
    return %c0_i32, %c0_i32_0 : i32, i32
  }
  func.func @transform_7(%arg0: i32) -> (i32, i32) {
    %c0_i32 = arith.constant 0 : i32
    %c0_i32_0 = arith.constant 0 : i32
    return %arg0, %c0_i32 : i32, i32
  }
}

</mosaic_0001>

<llo_original>
// kernel: affine_coupling_forward.1
$region0: #{affine_coupling_forward.1}
  #allocation0 [shape = 'u32[]', space=smem, size = 0x4, offset = 0x4, fixed_abs, tag = 'smem constant byte address 0x4 - core index']
  #allocation1 [shape = 'u32[144,128]{1,0:T(1,128)}', space=vmem, size = 0x12000, scoped, tag = 'internal scratch']
  %s0 = inlined_call_operand.vmem [shape: f32[128,256], index: 0, kind: input, shape index: {}]
  %s1 = inlined_call_operand.vmem [shape: bf16[128,512], index: 1, kind: input, shape index: {}]
  %s2 = inlined_call_operand.vmem [shape: f32[1,512], index: 2, kind: input, shape index: {}]
  %s3 = inlined_call_operand.vmem [shape: bf16[512,128], index: 3, kind: input, shape index: {}]
  %s4 = inlined_call_operand.vmem [shape: f32[1,128], index: 4, kind: input, shape index: {}]
  %s5 = inlined_call_operand.vmem [shape: bf16[512,128], index: 5, kind: input, shape index: {}]
  %s6 = inlined_call_operand.vmem [shape: f32[1,128], index: 6, kind: input, shape index: {}]
  %s7 = inlined_call_operand.hbm [shape: f32[128,256], index: 7, kind: output, shape index: {}]
  %s8 = sld [smem:[#allocation0]]
  $region38: #{affine_coupling_forward.1} parent=0
    _
  %s10 = ssub.s32 1, %s8
  %s11 = scalar_select 0, %s10, %s8
  $region1: #{affine_coupling_forward.1} parent=0
    #allocation2 [shape = 'u8[131072]{0}', space=vmem, size = 0x20000, scoped, tag = 'output window, operand 0, single buffered']
    #allocation3 [shape = 's32[1]{0}', space=sflag, size = 0x4, scoped, tag = 'scoped memory for affine_coupling_forward.1']
    %12 = vsyncpa [#allocation3], 0
    // Predicated region
    $region2: #{affine_coupling_forward.1} parent=1 // pred_check
      _
    $region3: #{affine_coupling_forward.1} parent=1 // pred_check_branch
      %14 = sbr.rel (0) target = $region5
    $region4: #{affine_coupling_forward.1} parent=1 // pred_region
      _
    $region5: #{affine_coupling_forward.1} parent=1 // pred_fallthru
      _
    // Predicated region
    $region6: #{affine_coupling_forward.1} parent=1 // pred_check
      _
    $region7: #{affine_coupling_forward.1} parent=1 // pred_check_branch
      %16 = sbr.rel (0) target = $region9
    $region8: #{affine_coupling_forward.1} parent=1 // pred_region
      _
    $region9: #{affine_coupling_forward.1} parent=1 // pred_fallthru
      _
    // Predicated region
    $region10: #{affine_coupling_forward.1} parent=1 // pred_check
      _
    $region11: #{affine_coupling_forward.1} parent=1 // pred_check_branch
      %18 = sbr.rel (0) target = $region13
    $region12: #{affine_coupling_forward.1} parent=1 // pred_region
      _
    $region13: #{affine_coupling_forward.1} parent=1 // pred_fallthru
      _
    // Predicated region
    $region14: #{affine_coupling_forward.1} parent=1 // pred_check
      _
    $region15: #{affine_coupling_forward.1} parent=1 // pred_check_branch
      %20 = sbr.rel (0) target = $region17
    $region16: #{affine_coupling_forward.1} parent=1 // pred_region
      _
    $region17: #{affine_coupling_forward.1} parent=1 // pred_fallthru
      _
    // Predicated region
    $region18: #{affine_coupling_forward.1} parent=1 // pred_check
      _
    $region19: #{affine_coupling_forward.1} parent=1 // pred_check_branch
      %22 = sbr.rel (0) target = $region21
    $region20: #{affine_coupling_forward.1} parent=1 // pred_region
      _
    $region21: #{affine_coupling_forward.1} parent=1 // pred_fallthru
      _
    // Predicated region
    $region22: #{affine_coupling_forward.1} parent=1 // pred_check
      _
    $region23: #{affine_coupling_forward.1} parent=1 // pred_check_branch
      %24 = sbr.rel (0) target = $region25
    $region24: #{affine_coupling_forward.1} parent=1 // pred_region
      _
    $region25: #{affine_coupling_forward.1} parent=1 // pred_fallthru
      _
    // Predicated region
    $region26: #{affine_coupling_forward.1} parent=1 // pred_check
      _
    $region27: #{affine_coupling_forward.1} parent=1 // pred_check_branch
      %26 = sbr.rel (0) target = $region29
    $region28: #{affine_coupling_forward.1} parent=1 // pred_region
      _
    $region29: #{affine_coupling_forward.1} parent=1 // pred_fallthru
      _
    %v28 = vld [vmem:[%s0] sm:$0xff]
    %v29 = vld [vmem:[%s0 + $0x8] sm:$0xff]
    %v30 = vld [vmem:[%s0 + $0x10] sm:$0xff]
    %v31 = vld [vmem:[%s0 + $0x18] sm:$0xff]
    %v32 = vld [vmem:[%s0 + $0x20] sm:$0xff]
    %v33 = vld [vmem:[%s0 + $0x28] sm:$0xff]
    %v34 = vld [vmem:[%s0 + $0x30] sm:$0xff]
    %v35 = vld [vmem:[%s0 + $0x38] sm:$0xff]
    %v36 = vld [vmem:[%s0 + $0x40] sm:$0xff]
    %v37 = vld [vmem:[%s0 + $0x48] sm:$0xff]
    %v38 = vld [vmem:[%s0 + $0x50] sm:$0xff]
    %v39 = vld [vmem:[%s0 + $0x58] sm:$0xff]
    %v40 = vld [vmem:[%s0 + $0x60] sm:$0xff]
    %v41 = vld [vmem:[%s0 + $0x68] sm:$0xff]
    %v42 = vld [vmem:[%s0 + $0x70] sm:$0xff]
    %v43 = vld [vmem:[%s0 + $0x78] sm:$0xff]
    %v44 = vld [vmem:[%s0 + $0x80] sm:$0xff]
    %v45 = vld [vmem:[%s0 + $0x88] sm:$0xff]
    %v46 = vld [vmem:[%s0 + $0x90] sm:$0xff]
    %v47 = vld [vmem:[%s0 + $0x98] sm:$0xff]
    %v48 = vld [vmem:[%s0 + $0xa0] sm:$0xff]
    %v49 = vld [vmem:[%s0 + $0xa8] sm:$0xff]
    %v50 = vld [vmem:[%s0 + $0xb0] sm:$0xff]
    %v51 = vld [vmem:[%s0 + $0xb8] sm:$0xff]
    %v52 = vld [vmem:[%s0 + $0xc0] sm:$0xff]
    %v53 = vld [vmem:[%s0 + $0xc8] sm:$0xff]
    %v54 = vld [vmem:[%s0 + $0xd0] sm:$0xff]
    %v55 = vld [vmem:[%s0 + $0xd8] sm:$0xff]
    %v56 = vld [vmem:[%s0 + $0xe0] sm:$0xff]
    %v57 = vld [vmem:[%s0 + $0xe8] sm:$0xff]
    %v58 = vld [vmem:[%s0 + $0xf0] sm:$0xff]
    %v59 = vld [vmem:[%s0 + $0xf8] sm:$0xff]
    %v60 = vpack.c.bf16 %v30, %v28
    %v61 = vpack.c.bf16 %v34, %v32
    %v62 = vpack.c.bf16 %v38, %v36
    %v63 = vpack.c.bf16 %v42, %v40
    %v64 = vpack.c.bf16 %v46, %v44
    %v65 = vpack.c.bf16 %v50, %v48
    %v66 = vpack.c.bf16 %v54, %v52
    %v67 = vpack.c.bf16 %v58, %v56
    %v68 = vld [vmem:[%s1] sm:$0xff]
    %v69 = vld [vmem:[%s1 + $0x8] sm:$0xff]
    %v70 = vld [vmem:[%s1 + $0x10] sm:$0xff]
    %v71 = vld [vmem:[%s1 + $0x18] sm:$0xff]
    %v72 = vld [vmem:[%s1 + $0x20] sm:$0xff]
    %v73 = vld [vmem:[%s1 + $0x28] sm:$0xff]
    %v74 = vld [vmem:[%s1 + $0x30] sm:$0xff]
    %v75 = vld [vmem:[%s1 + $0x38] sm:$0xff]
    %v76 = vld [vmem:[%s1 + $0x40] sm:$0xff]
    %v77 = vld [vmem:[%s1 + $0x48] sm:$0xff]
    %v78 = vld [vmem:[%s1 + $0x50] sm:$0xff]
    %v79 = vld [vmem:[%s1 + $0x58] sm:$0xff]
    %v80 = vld [vmem:[%s1 + $0x60] sm:$0xff]
    %v81 = vld [vmem:[%s1 + $0x68] sm:$0xff]
    %v82 = vld [vmem:[%s1 + $0x70] sm:$0xff]
    %v83 = vld [vmem:[%s1 + $0x78] sm:$0xff]
    %v84 = vld [vmem:[%s1 + $0x80] sm:$0xff]
    %v85 = vld [vmem:[%s1 + $0x88] sm:$0xff]
    %v86 = vld [vmem:[%s1 + $0x90] sm:$0xff]
    %v87 = vld [vmem:[%s1 + $0x98] sm:$0xff]
    %v88 = vld [vmem:[%s1 + $0xa0] sm:$0xff]
    %v89 = vld [vmem:[%s1 + $0xa8] sm:$0xff]
    %v90 = vld [vmem:[%s1 + $0xb0] sm:$0xff]
    %v91 = vld [vmem:[%s1 + $0xb8] sm:$0xff]
    %v92 = vld [vmem:[%s1 + $0xc0] sm:$0xff]
    %v93 = vld [vmem:[%s1 + $0xc8] sm:$0xff]
    %v94 = vld [vmem:[%s1 + $0xd0] sm:$0xff]
    %v95 = vld [vmem:[%s1 + $0xd8] sm:$0xff]
    %v96 = vld [vmem:[%s1 + $0xe0] sm:$0xff]
    %v97 = vld [vmem:[%s1 + $0xe8] sm:$0xff]
    %v98 = vld [vmem:[%s1 + $0xf0] sm:$0xff]
    %v99 = vld [vmem:[%s1 + $0xf8] sm:$0xff]
    %v100 = vld [vmem:[%s2] sm:$0xf]
    %v102 = vlaneseq
    %v103 = vshrl.u32 %v102, 7
    %v104 = vsub.s32 0, %v103
    %v105 = vrot.slane %v100, %v104
    %v106 = vlaneseq
    %v107 = vshrl.u32 %v106, 7
    %v108 = vsub.s32 1, %v107
    %v109 = vrot.slane %v100, %v108
    %v110 = vlaneseq
    %v111 = vshrl.u32 %v110, 7
    %v112 = vsub.s32 2, %v111
    %v113 = vrot.slane %v100, %v112
    %v114 = vlaneseq
    %v115 = vshrl.u32 %v114, 7
    %v116 = vsub.s32 3, %v115
    %v117 = vrot.slane %v100, %v116
    %v154 = vunpack.c.l.b16 %v68
    %v155 = vunpack.c.h.b16 %v68
    %v156 = vunpack.c.l.b16 %v69
    %v157 = vunpack.c.h.b16 %v69
    %v158 = vunpack.c.l.b16 %v70
    %v159 = vunpack.c.h.b16 %v70
    %v160 = vunpack.c.l.b16 %v71
    %v161 = vunpack.c.h.b16 %v71
    %v162 = vunpack.c.l.b16 %v72
    %v163 = vunpack.c.h.b16 %v72
    %v164 = vunpack.c.l.b16 %v73
    %v165 = vunpack.c.h.b16 %v73
    %v166 = vunpack.c.l.b16 %v74
    %v167 = vunpack.c.h.b16 %v74
    %v168 = vunpack.c.l.b16 %v75
    %v169 = vunpack.c.h.b16 %v75
    %v170 = vunpack.c.l.b16 %v76
    %v171 = vunpack.c.h.b16 %v76
    %v172 = vunpack.c.l.b16 %v77
    %v173 = vunpack.c.h.b16 %v77
    %v174 = vunpack.c.l.b16 %v78
    %v175 = vunpack.c.h.b16 %v78
    %v176 = vunpack.c.l.b16 %v79
    %v177 = vunpack.c.h.b16 %v79
    %v178 = vunpack.c.l.b16 %v80
    %v179 = vunpack.c.h.b16 %v80
    %v180 = vunpack.c.l.b16 %v81
    %v181 = vunpack.c.h.b16 %v81
    %v182 = vunpack.c.l.b16 %v82
    %v183 = vunpack.c.h.b16 %v82
    %v184 = vunpack.c.l.b16 %v83
    %v185 = vunpack.c.h.b16 %v83
    %v186 = vunpack.c.l.b16 %v84
    %v187 = vunpack.c.h.b16 %v84
    %v188 = vunpack.c.l.b16 %v85
    %v189 = vunpack.c.h.b16 %v85
    %v190 = vunpack.c.l.b16 %v86
    %v191 = vunpack.c.h.b16 %v86
    %v192 = vunpack.c.l.b16 %v87
    %v193 = vunpack.c.h.b16 %v87
    %v194 = vunpack.c.l.b16 %v88
    %v195 = vunpack.c.h.b16 %v88
    %v196 = vunpack.c.l.b16 %v89
    %v197 = vunpack.c.h.b16 %v89
    %v198 = vunpack.c.l.b16 %v90
    %v199 = vunpack.c.h.b16 %v90
    %v200 = vunpack.c.l.b16 %v91
    %v201 = vunpack.c.h.b16 %v91
    %v202 = vunpack.c.l.b16 %v92
    %v203 = vunpack.c.h.b16 %v92
    %v204 = vunpack.c.l.b16 %v93
    %v205 = vunpack.c.h.b16 %v93
    %v206 = vunpack.c.l.b16 %v94
    %v207 = vunpack.c.h.b16 %v94
    %v208 = vunpack.c.l.b16 %v95
    %v209 = vunpack.c.h.b16 %v95
    %v210 = vunpack.c.l.b16 %v96
    %v211 = vunpack.c.h.b16 %v96
    %v212 = vunpack.c.l.b16 %v97
    %v213 = vunpack.c.h.b16 %v97
    %v214 = vunpack.c.l.b16 %v98
    %v215 = vunpack.c.h.b16 %v98
    %v216 = vunpack.c.l.b16 %v99
    %v217 = vunpack.c.h.b16 %v99
    %v218 = vpack.c.b16 %v158, %v154
    %v219 = vpack.c.b16 %v159, %v155
    %v220 = vpack.c.b16 %v160, %v156
    %v221 = vpack.c.b16 %v161, %v157
    %v222 = vpack.c.b16 %v166, %v162
    %v223 = vpack.c.b16 %v167, %v163
    %v224 = vpack.c.b16 %v168, %v164
    %v225 = vpack.c.b16 %v169, %v165
    %v226 = vpack.c.b16 %v174, %v170
    %v227 = vpack.c.b16 %v175, %v171
    %v228 = vpack.c.b16 %v176, %v172
    %v229 = vpack.c.b16 %v177, %v173
    %v230 = vpack.c.b16 %v182, %v178
    %v231 = vpack.c.b16 %v183, %v179
    %v232 = vpack.c.b16 %v184, %v180
    %v233 = vpack.c.b16 %v185, %v181
    %v234 = vpack.c.b16 %v190, %v186
    %v235 = vpack.c.b16 %v191, %v187
    %v236 = vpack.c.b16 %v192, %v188
    %v237 = vpack.c.b16 %v193, %v189
    %v238 = vpack.c.b16 %v198, %v194
    %v239 = vpack.c.b16 %v199, %v195
    %v240 = vpack.c.b16 %v200, %v196
    %v241 = vpack.c.b16 %v201, %v197
    %v242 = vpack.c.b16 %v206, %v202
    %v243 = vpack.c.b16 %v207, %v203
    %v244 = vpack.c.b16 %v208, %v204
    %v245 = vpack.c.b16 %v209, %v205
    %v246 = vpack.c.b16 %v214, %v210
    %v247 = vpack.c.b16 %v215, %v211
    %v248 = vpack.c.b16 %v216, %v212
    %v249 = vpack.c.b16 %v217, %v213
    %282 = vmatprep.subr.bf16.mxu0 %v219
    %283 = vmatpush1.bf16.msra.mxu0 %v218
    %284 = vmatprep.subr.bf16.mxu0 %v223
    %285 = vmatpush1.bf16.msra.mxu0 %v222
    %286 = vmatprep.subr.bf16.mxu0 %v227
    %287 = vmatpush1.bf16.msra.mxu0 %v226
    %288 = vmatprep.subr.bf16.mxu0 %v231
    %289 = vmatpush1.bf16.msra.mxu0 %v230
    %290 = vmatprep.subr.bf16.mxu0 %v235
    %291 = vmatpush1.bf16.msra.mxu0 %v234
    %292 = vmatprep.subr.bf16.mxu0 %v239
    %293 = vmatpush1.bf16.msra.mxu0 %v238
    %294 = vmatprep.subr.bf16.mxu0 %v243
    %295 = vmatpush1.bf16.msra.mxu0 %v242
    %296 = vmatprep.subr.bf16.mxu0 %v247
    %297 = vmatpush1.bf16.msra.mxu0 %v246
    %298 = vmatprep.subr.bf16.mxu0 0
    %299 = vmatpush1.bf16.msra.mxu0 0
    %300 = vmatprep.subr.bf16.mxu0 0
    %301 = vmatpush1.bf16.msra.mxu0 0
    %302 = vmatprep.subr.bf16.mxu0 0
    %303 = vmatpush1.bf16.msra.mxu0 0
    %304 = vmatprep.subr.bf16.mxu0 0
    %305 = vmatpush1.bf16.msra.mxu0 0
    %306 = vmatprep.subr.bf16.mxu0 0
    %307 = vmatpush1.bf16.msra.mxu0 0
    %308 = vmatprep.subr.bf16.mxu0 0
    %309 = vmatpush1.bf16.msra.mxu0 0
    %310 = vmatprep.subr.bf16.mxu0 0
    %311 = vmatpush1.bf16.msra.mxu0 0
    %312 = vmatprep.subr.bf16.mxu0 0
    %313 = vmatpush1.bf16.msra.mxu0 0
    %314 = vmatprep.mubr.bf16.mxu0 0
    %315 = vmatmul.mubr.bf16.gmra.mrb[0].mxu0 %v60
    %v316 = vpop.f32.mrb[0].mxu0
    %v317 = vadd.f32 %v105, %v316
    %v318 = vpop.f32.mrb[0].mxu0
    %v319 = vadd.f32 %v109, %v318
    %v320 = vpop.f32.mrb[0].mxu0
    %v321 = vadd.f32 %v105, %v320
    %v322 = vpop.f32.mrb[0].mxu0
    %v323 = vadd.f32 %v109, %v322
    %324 = vmatprep.mubr.bf16.mxu0 0
    %325 = vmatmul.mubr.bf16.gmra.mrb[0].mxu0 %v61
    %v326 = vpop.f32.mrb[0].mxu0
    %v327 = vadd.f32 %v105, %v326
    %v328 = vpop.f32.mrb[0].mxu0
    %v329 = vadd.f32 %v109, %v328
    %v330 = vpop.f32.mrb[0].mxu0
    %v331 = vadd.f32 %v105, %v330
    %v332 = vpop.f32.mrb[0].mxu0
    %v333 = vadd.f32 %v109, %v332
    %334 = vmatprep.mubr.bf16.mxu0 0
    %335 = vmatmul.mubr.bf16.gmra.mrb[0].mxu0 %v62
    %v336 = vpop.f32.mrb[0].mxu0
    %v337 = vadd.f32 %v105, %v336
    %v338 = vpop.f32.mrb[0].mxu0
    %v339 = vadd.f32 %v109, %v338
    %v340 = vpop.f32.mrb[0].mxu0
    %v341 = vadd.f32 %v105, %v340
    %v342 = vpop.f32.mrb[0].mxu0
    %v343 = vadd.f32 %v109, %v342
    %344 = vmatprep.mubr.bf16.mxu0 0
    %345 = vmatmul.mubr.bf16.gmra.mrb[0].mxu0 %v63
    %v346 = vpop.f32.mrb[0].mxu0
    %v347 = vadd.f32 %v105, %v346
    %v348 = vpop.f32.mrb[0].mxu0
    %v349 = vadd.f32 %v109, %v348
    %v350 = vpop.f32.mrb[0].mxu0
    %v351 = vadd.f32 %v105, %v350
    %v352 = vpop.f32.mrb[0].mxu0
    %v353 = vadd.f32 %v109, %v352
    %354 = vmatprep.mubr.bf16.mxu0 0
    %355 = vmatmul.mubr.bf16.gmra.mrb[0].mxu0 %v64
    %v356 = vpop.f32.mrb[0].mxu0
    %v357 = vadd.f32 %v105, %v356
    %v358 = vpop.f32.mrb[0].mxu0
    %v359 = vadd.f32 %v109, %v358
    %v360 = vpop.f32.mrb[0].mxu0
    %v361 = vadd.f32 %v105, %v360
    %v362 = vpop.f32.mrb[0].mxu0
    %v363 = vadd.f32 %v109, %v362
    %364 = vmatprep.mubr.bf16.mxu0 0
    %365 = vmatmul.mubr.bf16.gmra.mrb[0].mxu0 %v65
    %v366 = vpop.f32.mrb[0].mxu0
    %v367 = vadd.f32 %v105, %v366
    %v368 = vpop.f32.mrb[0].mxu0
    %v369 = vadd.f32 %v109, %v368
    %v370 = vpop.f32.mrb[0].mxu0
    %v371 = vadd.f32 %v105, %v370
    %v372 = vpop.f32.mrb[0].mxu0
    %v373 = vadd.f32 %v109, %v372
    %374 = vmatprep.mubr.bf16.mxu0 0
    %375 = vmatmul.mubr.bf16.gmra.mrb[0].mxu0 %v66
    %v376 = vpop.f32.mrb[0].mxu0
    %v377 = vadd.f32 %v105, %v376
    %v378 = vpop.f32.mrb[0].mxu0
    %v379 = vadd.f32 %v109, %v378
    %v380 = vpop.f32.mrb[0].mxu0
    %v381 = vadd.f32 %v105, %v380
    %v382 = vpop.f32.mrb[0].mxu0
    %v383 = vadd.f32 %v109, %v382
    %384 = vmatprep.mubr.bf16.mxu0 0
    %385 = vmatmul.mubr.bf16.gmra.mrb[0].mxu0 %v67
    %v386 = vpop.f32.mrb[0].mxu0
    %v387 = vadd.f32 %v105, %v386
    %v388 = vpop.f32.mrb[0].mxu0
    %v389 = vadd.f32 %v109, %v388
    %v390 = vpop.f32.mrb[0].mxu0
    %v391 = vadd.f32 %v105, %v390
    %v392 = vpop.f32.mrb[0].mxu0
    %v393 = vadd.f32 %v109, %v392
    %394 = vdwg.mxu0
    %395 = vmatprep.subr.bf16.mxu0 %v221
    %396 = vmatpush1.bf16.msra.mxu0 %v220
    %397 = vmatprep.subr.bf16.mxu0 %v225
    %398 = vmatpush1.bf16.msra.mxu0 %v224
    %399 = vmatprep.subr.bf16.mxu0 %v229
    %400 = vmatpush1.bf16.msra.mxu0 %v228
    %401 = vmatprep.subr.bf16.mxu0 %v233
    %402 = vmatpush1.bf16.msra.mxu0 %v232
    %403 = vmatprep.subr.bf16.mxu0 %v237
    %404 = vmatpush1.bf16.msra.mxu0 %v236
    %405 = vmatprep.subr.bf16.mxu0 %v241
    %406 = vmatpush1.bf16.msra.mxu0 %v240
    %407 = vmatprep.subr.bf16.mxu0 %v245
    %408 = vmatpush1.bf16.msra.mxu0 %v244
    %409 = vmatprep.subr.bf16.mxu0 %v249
    %410 = vmatpush1.bf16.msra.mxu0 %v248
    %411 = vmatprep.subr.bf16.mxu0 0
    %412 = vmatpush1.bf16.msra.mxu0 0
    %413 = vmatprep.subr.bf16.mxu0 0
    %414 = vmatpush1.bf16.msra.mxu0 0
    %415 = vmatprep.subr.bf16.mxu0 0
    %416 = vmatpush1.bf16.msra.mxu0 0
    %417 = vmatprep.subr.bf16.mxu0 0
    %418 = vmatpush1.bf16.msra.mxu0 0
    %419 = vmatprep.subr.bf16.mxu0 0
    %420 = vmatpush1.bf16.msra.mxu0 0
    %421 = vmatprep.subr.bf16.mxu0 0
    %422 = vmatpush1.bf16.msra.mxu0 0
    %423 = vmatprep.subr.bf16.mxu0 0
    %424 = vmatpush1.bf16.msra.mxu0 0
    %425 = vmatprep.subr.bf16.mxu0 0
    %426 = vmatpush1.bf16.msra.mxu0 0
    %427 = vmatprep.mubr.bf16.mxu0 0
    %428 = vmatmul.mubr.bf16.gmra.mrb[0].mxu0 %v60
    %v429 = vpop.f32.mrb[0].mxu0
    %v430 = vadd.f32 %v113, %v429
    %v431 = vpop.f32.mrb[0].mxu0
    %v432 = vadd.f32 %v117, %v431
    %v433 = vpop.f32.mrb[0].mxu0
    %v434 = vadd.f32 %v113, %v433
    %v435 = vpop.f32.mrb[0].mxu0
    %v436 = vadd.f32 %v117, %v435
    %437 = vmatprep.mubr.bf16.mxu0 0
    %438 = vmatmul.mubr.bf16.gmra.mrb[0].mxu0 %v61
    %v439 = vpop.f32.mrb[0].mxu0
    %v440 = vadd.f32 %v113, %v439
    %v441 = vpop.f32.mrb[0].mxu0
    %v442 = vadd.f32 %v117, %v441
    %v443 = vpop.f32.mrb[0].mxu0
    %v444 = vadd.f32 %v113, %v443
    %v445 = vpop.f32.mrb[0].mxu0
    %v446 = vadd.f32 %v117, %v445
    %447 = vmatprep.mubr.bf16.mxu0 0
    %448 = vmatmul.mubr.bf16.gmra.mrb[0].mxu0 %v62
    %v449 = vpop.f32.mrb[0].mxu0
    %v450 = vadd.f32 %v113, %v449
    %v451 = vpop.f32.mrb[0].mxu0
    %v452 = vadd.f32 %v117, %v451
    %v453 = vpop.f32.mrb[0].mxu0
    %v454 = vadd.f32 %v113, %v453
    %v455 = vpop.f32.mrb[0].mxu0
    %v456 = vadd.f32 %v117, %v455
    %457 = vmatprep.mubr.bf16.mxu0 0
    %458 = vmatmul.mubr.bf16.gmra.mrb[0].mxu0 %v63
    %v459 = vpop.f32.mrb[0].mxu0
    %v460 = vadd.f32 %v113, %v459
    %v461 = vpop.f32.mrb[0].mxu0
    %v462 = vadd.f32 %v117, %v461
    %v463 = vpop.f32.mrb[0].mxu0
    %v464 = vadd.f32 %v113, %v463
    %v465 = vpop.f32.mrb[0].mxu0
    %v466 = vadd.f32 %v117, %v465
    %467 = vmatprep.mubr.bf16.mxu0 0
    %468 = vmatmul.mubr.bf16.gmra.mrb[0].mxu0 %v64
    %v469 = vpop.f32.mrb[0].mxu0
    %v470 = vadd.f32 %v113, %v469
    %v471 = vpop.f32.mrb[0].mxu0
    %v472 = vadd.f32 %v117, %v471
    %v473 = vpop.f32.mrb[0].mxu0
    %v474 = vadd.f32 %v113, %v473
    %v475 = vpop.f32.mrb[0].mxu0
    %v476 = vadd.f32 %v117, %v475
    %477 = vmatprep.mubr.bf16.mxu0 0
    %478 = vmatmul.mubr.bf16.gmra.mrb[0].mxu0 %v65
    %v479 = vpop.f32.mrb[0].mxu0
    %v480 = vadd.f32 %v113, %v479
    %v481 = vpop.f32.mrb[0].mxu0
    %v482 = vadd.f32 %v117, %v481
    %v483 = vpop.f32.mrb[0].mxu0
    %v484 = vadd.f32 %v113, %v483
    %v485 = vpop.f32.mrb[0].mxu0
    %v486 = vadd.f32 %v117, %v485
    %487 = vmatprep.mubr.bf16.mxu0 0
    %488 = vmatmul.mubr.bf16.gmra.mrb[0].mxu0 %v66
    %v489 = vpop.f32.mrb[0].mxu0
    %v490 = vadd.f32 %v113, %v489
    %v491 = vpop.f32.mrb[0].mxu0
    %v492 = vadd.f32 %v117, %v491
    %v493 = vpop.f32.mrb[0].mxu0
    %v494 = vadd.f32 %v113, %v493
    %v495 = vpop.f32.mrb[0].mxu0
    %v496 = vadd.f32 %v117, %v495
    %497 = vmatprep.mubr.bf16.mxu0 0
    %498 = vmatmul.mubr.bf16.gmra.mrb[0].mxu0 %v67
    %v499 = vpop.f32.mrb[0].mxu0
    %v500 = vadd.f32 %v113, %v499
    %v501 = vpop.f32.mrb[0].mxu0
    %v502 = vadd.f32 %v117, %v501
    %v503 = vpop.f32.mrb[0].mxu0
    %v504 = vadd.f32 %v113, %v503
    %v505 = vpop.f32.mrb[0].mxu0
    %v506 = vadd.f32 %v117, %v505
    %507 = vdwg.mxu0
    %v508 = vmax.f32 %v317, 0.0
    %v509 = vmax.f32 %v319, 0.0
    %v510 = vmax.f32 %v430, 0.0
    %v511 = vmax.f32 %v432, 0.0
    %v512 = vmax.f32 %v321, 0.0
    %v513 = vmax.f32 %v323, 0.0
    %v514 = vmax.f32 %v434, 0.0
    %v515 = vmax.f32 %v436, 0.0
    %v516 = vmax.f32 %v327, 0.0
    %v517 = vmax.f32 %v329, 0.0
    %v518 = vmax.f32 %v440, 0.0
    %v519 = vmax.f32 %v442, 0.0
    %v520 = vmax.f32 %v331, 0.0
    %v521 = vmax.f32 %v333, 0.0
    %v522 = vmax.f32 %v444, 0.0
    %v523 = vmax.f32 %v446, 0.0
    %v524 = vmax.f32 %v337, 0.0
    %v525 = vmax.f32 %v339, 0.0
    %v526 = vmax.f32 %v450, 0.0
    %v527 = vmax.f32 %v452, 0.0
    %v528 = vmax.f32 %v341, 0.0
    %v529 = vmax.f32 %v343, 0.0
    %v530 = vmax.f32 %v454, 0.0
    %v531 = vmax.f32 %v456, 0.0
    %v532 = vmax.f32 %v347, 0.0
    %v533 = vmax.f32 %v349, 0.0
    %v534 = vmax.f32 %v460, 0.0
    %v535 = vmax.f32 %v462, 0.0
    %v536 = vmax.f32 %v351, 0.0
    %v537 = vmax.f32 %v353, 0.0
    %v538 = vmax.f32 %v464, 0.0
    %v539 = vmax.f32 %v466, 0.0
    %v540 = vmax.f32 %v357, 0.0
    %v541 = vmax.f32 %v359, 0.0
    %v542 = vmax.f32 %v470, 0.0
    %v543 = vmax.f32 %v472, 0.0
    %v544 = vmax.f32 %v361, 0.0
    %v545 = vmax.f32 %v363, 0.0
    %v546 = vmax.f32 %v474, 0.0
    %v547 = vmax.f32 %v476, 0.0
    %v548 = vmax.f32 %v367, 0.0
    %v549 = vmax.f32 %v369, 0.0
    %v550 = vmax.f32 %v480, 0.0
    %v551 = vmax.f32 %v482, 0.0
    %v552 = vmax.f32 %v371, 0.0
    %v553 = vmax.f32 %v373, 0.0
    %v554 = vmax.f32 %v484, 0.0
    %v555 = vmax.f32 %v486, 0.0
    %v556 = vmax.f32 %v377, 0.0
    %v557 = vmax.f32 %v379, 0.0
    %v558 = vmax.f32 %v490, 0.0
    %v559 = vmax.f32 %v492, 0.0
    %v560 = vmax.f32 %v381, 0.0
    %v561 = vmax.f32 %v383, 0.0
    %v562 = vmax.f32 %v494, 0.0
    %v563 = vmax.f32 %v496, 0.0
    %v564 = vmax.f32 %v387, 0.0
    %v565 = vmax.f32 %v389, 0.0
    %v566 = vmax.f32 %v500, 0.0
    %v567 = vmax.f32 %v502, 0.0
    %v568 = vmax.f32 %v391, 0.0
    %v569 = vmax.f32 %v393, 0.0
    %v570 = vmax.f32 %v504, 0.0
    %v571 = vmax.f32 %v506, 0.0
    %v572 = vpack.c.bf16 %v512, %v508
    %v573 = vpack.c.bf16 %v513, %v509
    %v574 = vpack.c.bf16 %v514, %v510
    %v575 = vpack.c.bf16 %v515, %v511
    %v576 = vpack.c.bf16 %v520, %v516
    %v577 = vpack.c.bf16 %v521, %v517
    %v578 = vpack.c.bf16 %v522, %v518
    %v579 = vpack.c.bf16 %v523, %v519
    %v580 = vpack.c.bf16 %v528, %v524
    %v581 = vpack.c.bf16 %v529, %v525
    %v582 = vpack.c.bf16 %v530, %v526
    %v583 = vpack.c.bf16 %v531, %v527
    %v584 = vpack.c.bf16 %v536, %v532
    %v585 = vpack.c.bf16 %v537, %v533
    %v586 = vpack.c.bf16 %v538, %v534
    %v587 = vpack.c.bf16 %v539, %v535
    %v588 = vpack.c.bf16 %v544, %v540
    %v589 = vpack.c.bf16 %v545, %v541
    %v590 = vpack.c.bf16 %v546, %v542
    %v591 = vpack.c.bf16 %v547, %v543
    %v592 = vpack.c.bf16 %v552, %v548
    %v593 = vpack.c.bf16 %v553, %v549
    %v594 = vpack.c.bf16 %v554, %v550
    %v595 = vpack.c.bf16 %v555, %v551
    %v596 = vpack.c.bf16 %v560, %v556
    %v597 = vpack.c.bf16 %v561, %v557
    %v598 = vpack.c.bf16 %v562, %v558
    %v599 = vpack.c.bf16 %v563, %v559
    %v600 = vpack.c.bf16 %v568, %v564
    %v601 = vpack.c.bf16 %v569, %v565
    %v602 = vpack.c.bf16 %v570, %v566
    %v603 = vpack.c.bf16 %v571, %v567
    %v604 = vld [vmem:[%s3] sm:$0xf]
    %v605 = vld [vmem:[%s3 + $0x4] sm:$0xf]
    %v606 = vld [vmem:[%s3 + $0x8] sm:$0xf]
    %v607 = vld [vmem:[%s3 + $0xc] sm:$0xf]
    %v608 = vld [vmem:[%s3 + $0x10] sm:$0xf]
    %v609 = vld [vmem:[%s3 + $0x14] sm:$0xf]
    %v610 = vld [vmem:[%s3 + $0x18] sm:$0xf]
    %v611 = vld [vmem:[%s3 + $0x1c] sm:$0xf]
    %v612 = vld [vmem:[%s3 + $0x20] sm:$0xf]
    %v613 = vld [vmem:[%s3 + $0x24] sm:$0xf]
    %v614 = vld [vmem:[%s3 + $0x28] sm:$0xf]
    %v615 = vld [vmem:[%s3 + $0x2c] sm:$0xf]
    %v616 = vld [vmem:[%s3 + $0x30] sm:$0xf]
    %v617 = vld [vmem:[%s3 + $0x34] sm:$0xf]
    %v618 = vld [vmem:[%s3 + $0x38] sm:$0xf]
    %v619 = vld [vmem:[%s3 + $0x3c] sm:$0xf]
    %v620 = vld [vmem:[%s3 + $0x40] sm:$0xf]
    %v621 = vld [vmem:[%s3 + $0x44] sm:$0xf]
    %v622 = vld [vmem:[%s3 + $0x48] sm:$0xf]
    %v623 = vld [vmem:[%s3 + $0x4c] sm:$0xf]
    %v624 = vld [vmem:[%s3 + $0x50] sm:$0xf]
    %v625 = vld [vmem:[%s3 + $0x54] sm:$0xf]
    %v626 = vld [vmem:[%s3 + $0x58] sm:$0xf]
    %v627 = vld [vmem:[%s3 + $0x5c] sm:$0xf]
    %v628 = vld [vmem:[%s3 + $0x60] sm:$0xf]
    %v629 = vld [vmem:[%s3 + $0x64] sm:$0xf]
    %v630 = vld [vmem:[%s3 + $0x68] sm:$0xf]
    %v631 = vld [vmem:[%s3 + $0x6c] sm:$0xf]
    %v632 = vld [vmem:[%s3 + $0x70] sm:$0xf]
    %v633 = vld [vmem:[%s3 + $0x74] sm:$0xf]
    %v634 = vld [vmem:[%s3 + $0x78] sm:$0xf]
    %v635 = vld [vmem:[%s3 + $0x7c] sm:$0xf]
    %v636 = vld [vmem:[%s3 + $0x80] sm:$0xf]
    %v637 = vld [vmem:[%s3 + $0x84] sm:$0xf]
    %v638 = vld [vmem:[%s3 + $0x88] sm:$0xf]
    %v639 = vld [vmem:[%s3 + $0x8c] sm:$0xf]
    %v640 = vld [vmem:[%s3 + $0x90] sm:$0xf]
    %v641 = vld [vmem:[%s3 + $0x94] sm:$0xf]
    %v642 = vld [vmem:[%s3 + $0x98] sm:$0xf]
    %v643 = vld [vmem:[%s3 + $0x9c] sm:$0xf]
    %v644 = vld [vmem:[%s3 + $0xa0] sm:$0xf]
    %v645 = vld [vmem:[%s3 + $0xa4] sm:$0xf]
    %v646 = vld [vmem:[%s3 + $0xa8] sm:$0xf]
    %v647 = vld [vmem:[%s3 + $0xac] sm:$0xf]
    %v648 = vld [vmem:[%s3 + $0xb0] sm:$0xf]
    %v649 = vld [vmem:[%s3 + $0xb4] sm:$0xf]
    %v650 = vld [vmem:[%s3 + $0xb8] sm:$0xf]
    %v651 = vld [vmem:[%s3 + $0xbc] sm:$0xf]
    %v652 = vld [vmem:[%s3 + $0xc0] sm:$0xf]
    %v653 = vld [vmem:[%s3 + $0xc4] sm:$0xf]
    %v654 = vld [vmem:[%s3 + $0xc8] sm:$0xf]
    %v655 = vld [vmem:[%s3 + $0xcc] sm:$0xf]
    %v656 = vld [vmem:[%s3 + $0xd0] sm:$0xf]
    %v657 = vld [vmem:[%s3 + $0xd4] sm:$0xf]
    %v658 = vld [vmem:[%s3 + $0xd8] sm:$0xf]
    %v659 = vld [vmem:[%s3 + $0xdc] sm:$0xf]
    %v660 = vld [vmem:[%s3 + $0xe0] sm:$0xf]
    %v661 = vld [vmem:[%s3 + $0xe4] sm:$0xf]
    %v662 = vld [vmem:[%s3 + $0xe8] sm:$0xf]
    %v663 = vld [vmem:[%s3 + $0xec] sm:$0xf]
    %v664 = vld [vmem:[%s3 + $0xf0] sm:$0xf]
    %v665 = vld [vmem:[%s3 + $0xf4] sm:$0xf]
    %v666 = vld [vmem:[%s3 + $0xf8] sm:$0xf]
    %v667 = vld [vmem:[%s3 + $0xfc] sm:$0xf]
    %v668 = vld [vmem:[%s4] sm:$0x1]
    %v670 = vlaneseq
    %v671 = vshrl.u32 %v670, 7
    %v672 = vsub.s32 0, %v671
    %v673 = vrot.slane %v668, %v672
    %v739 = vunpack.c.l.b16 %v604
    %v740 = vunpack.c.l.b16 %v605
    %v741 = vunpack.c.l.b16 %v606
    %v742 = vunpack.c.l.b16 %v607
    %v743 = vunpack.c.l.b16 %v608
    %v744 = vunpack.c.l.b16 %v609
    %v745 = vunpack.c.l.b16 %v610
    %v746 = vunpack.c.l.b16 %v611
    %v747 = vunpack.c.l.b16 %v612
    %v748 = vunpack.c.l.b16 %v613
    %v749 = vunpack.c.l.b16 %v614
    %v750 = vunpack.c.l.b16 %v615
    %v751 = vunpack.c.l.b16 %v616
    %v752 = vunpack.c.l.b16 %v617
    %v753 = vunpack.c.l.b16 %v618
    %v754 = vunpack.c.l.b16 %v619
    %v755 = vunpack.c.l.b16 %v620
    %v756 = vunpack.c.l.b16 %v621
    %v757 = vunpack.c.l.b16 %v622
    %v758 = vunpack.c.l.b16 %v623
    %v759 = vunpack.c.l.b16 %v624
    %v760 = vunpack.c.l.b16 %v625
    %v761 = vunpack.c.l.b16 %v626
    %v762 = vunpack.c.l.b16 %v627
    %v763 = vunpack.c.l.b16 %v628
    %v764 = vunpack.c.l.b16 %v629
    %v765 = vunpack.c.l.b16 %v630
    %v766 = vunpack.c.l.b16 %v631
    %v767 = vunpack.c.l.b16 %v632
    %v768 = vunpack.c.l.b16 %v633
    %v769 = vunpack.c.l.b16 %v634
    %v770 = vunpack.c.l.b16 %v635
    %v771 = vunpack.c.l.b16 %v636
    %v772 = vunpack.c.l.b16 %v637
    %v773 = vunpack.c.l.b16 %v638
    %v774 = vunpack.c.l.b16 %v639
    %v775 = vunpack.c.l.b16 %v640
    %v776 = vunpack.c.l.b16 %v641
    %v777 = vunpack.c.l.b16 %v642
    %v778 = vunpack.c.l.b16 %v643
    %v779 = vunpack.c.l.b16 %v644
    %v780 = vunpack.c.l.b16 %v645
    %v781 = vunpack.c.l.b16 %v646
    %v782 = vunpack.c.l.b16 %v647
    %v783 = vunpack.c.l.b16 %v648
    %v784 = vunpack.c.l.b16 %v649
    %v785 = vunpack.c.l.b16 %v650
    %v786 = vunpack.c.l.b16 %v651
    %v787 = vunpack.c.l.b16 %v652
    %v788 = vunpack.c.l.b16 %v653
    %v789 = vunpack.c.l.b16 %v654
    %v790 = vunpack.c.l.b16 %v655
    %v791 = vunpack.c.l.b16 %v656
    %v792 = vunpack.c.l.b16 %v657
    %v793 = vunpack.c.l.b16 %v658
    %v794 = vunpack.c.l.b16 %v659
    %v795 = vunpack.c.l.b16 %v660
    %v796 = vunpack.c.l.b16 %v661
    %v797 = vunpack.c.l.b16 %v662
    %v798 = vunpack.c.l.b16 %v663
    %v799 = vunpack.c.l.b16 %v664
    %v800 = vunpack.c.l.b16 %v665
    %v801 = vunpack.c.l.b16 %v666
    %v802 = vunpack.c.l.b16 %v667
    %v803 = vpack.c.b16 %v740, %v739
    %v804 = vpack.c.b16 %v742, %v741
    %v805 = vpack.c.b16 %v744, %v743
    %v806 = vpack.c.b16 %v746, %v745
    %v807 = vpack.c.b16 %v748, %v747
    %v808 = vpack.c.b16 %v750, %v749
    %v809 = vpack.c.b16 %v752, %v751
    %v810 = vpack.c.b16 %v754, %v753
    %v811 = vpack.c.b16 %v756, %v755
    %v812 = vpack.c.b16 %v758, %v757
    %v813 = vpack.c.b16 %v760, %v759
    %v814 = vpack.c.b16 %v762, %v761
    %v815 = vpack.c.b16 %v764, %v763
    %v816 = vpack.c.b16 %v766, %v765
    %v817 = vpack.c.b16 %v768, %v767
    %v818 = vpack.c.b16 %v770, %v769
    %v819 = vpack.c.b16 %v772, %v771
    %v820 = vpack.c.b16 %v774, %v773
    %v821 = vpack.c.b16 %v776, %v775
    %v822 = vpack.c.b16 %v778, %v777
    %v823 = vpack.c.b16 %v780, %v779
    %v824 = vpack.c.b16 %v782, %v781
    %v825 = vpack.c.b16 %v784, %v783
    %v826 = vpack.c.b16 %v786, %v785
    %v827 = vpack.c.b16 %v788, %v787
    %v828 = vpack.c.b16 %v790, %v789
    %v829 = vpack.c.b16 %v792, %v791
    %v830 = vpack.c.b16 %v794, %v793
    %v831 = vpack.c.b16 %v796, %v795
    %v832 = vpack.c.b16 %v798, %v797
    %v833 = vpack.c.b16 %v800, %v799
    %v834 = vpack.c.b16 %v802, %v801
    %867 = vmatprep.subr.bf16.mxu0 0
    %868 = vmatpush1.bf16.msra.mxu0 %v803
    %869 = vmatprep.subr.bf16.mxu0 0
    %870 = vmatpush1.bf16.msra.mxu0 %v804
    %871 = vmatprep.subr.bf16.mxu0 0
    %872 = vmatpush1.bf16.msra.mxu0 %v805
    %873 = vmatprep.subr.bf16.mxu0 0
    %874 = vmatpush1.bf16.msra.mxu0 %v806
    %875 = vmatprep.subr.bf16.mxu0 0
    %876 = vmatpush1.bf16.msra.mxu0 %v807
    %877 = vmatprep.subr.bf16.mxu0 0
    %878 = vmatpush1.bf16.msra.mxu0 %v808
    %879 = vmatprep.subr.bf16.mxu0 0
    %880 = vmatpush1.bf16.msra.mxu0 %v809
    %881 = vmatprep.subr.bf16.mxu0 0
    %882 = vmatpush1.bf16.msra.mxu0 %v810
    %883 = vmatprep.subr.bf16.mxu0 0
    %884 = vmatpush1.bf16.msra.mxu0 %v811
    %885 = vmatprep.subr.bf16.mxu0 0
    %886 = vmatpush1.bf16.msra.mxu0 %v812
    %887 = vmatprep.subr.bf16.mxu0 0
    %888 = vmatpush1.bf16.msra.mxu0 %v813
    %889 = vmatprep.subr.bf16.mxu0 0
    %890 = vmatpush1.bf16.msra.mxu0 %v814
    %891 = vmatprep.subr.bf16.mxu0 0
    %892 = vmatpush1.bf16.msra.mxu0 %v815
    %893 = vmatprep.subr.bf16.mxu0 0
    %894 = vmatpush1.bf16.msra.mxu0 %v816
    %895 = vmatprep.subr.bf16.mxu0 0
    %896 = vmatpush1.bf16.msra.mxu0 %v817
    %897 = vmatprep.subr.bf16.mxu0 0
    %898 = vmatpush1.bf16.msra.mxu0 %v818
    %899 = vmatprep.mubr.bf16.mxu0 %v573
    %900 = vmatmul.mubr.bf16.gmra.mrb[0].mxu0 %v572
    %v901 = vpop.f32.mrb[0].mxu0
    %v902 = vadd.f32 %v673, %v901
    %v903 = vpop.f32.mrb[0].mxu0
    %v904 = vpop.f32.mrb[0].mxu0
    %v905 = vadd.f32 %v673, %v904
    %v906 = vpop.f32.mrb[0].mxu0
    %907 = vmatprep.mubr.bf16.mxu0 %v577
    %908 = vmatmul.mubr.bf16.gmra.mrb[0].mxu0 %v576
    %v909 = vpop.f32.mrb[0].mxu0
    %v910 = vadd.f32 %v673, %v909
    %v911 = vpop.f32.mrb[0].mxu0
    %v912 = vpop.f32.mrb[0].mxu0
    %v913 = vadd.f32 %v673, %v912
    %v914 = vpop.f32.mrb[0].mxu0
    %915 = vmatprep.mubr.bf16.mxu0 %v581
    %916 = vmatmul.mubr.bf16.gmra.mrb[0].mxu0 %v580
    %v917 = vpop.f32.mrb[0].mxu0
    %v918 = vadd.f32 %v673, %v917
    %v919 = vpop.f32.mrb[0].mxu0
    %v920 = vpop.f32.mrb[0].mxu0
    %v921 = vadd.f32 %v673, %v920
    %v922 = vpop.f32.mrb[0].mxu0
    %923 = vmatprep.mubr.bf16.mxu0 %v585
    %924 = vmatmul.mubr.bf16.gmra.mrb[0].mxu0 %v584
    %v925 = vpop.f32.mrb[0].mxu0
    %v926 = vadd.f32 %v673, %v925
    %v927 = vpop.f32.mrb[0].mxu0
    %v928 = vpop.f32.mrb[0].mxu0
    %v929 = vadd.f32 %v673, %v928
    %v930 = vpop.f32.mrb[0].mxu0
    %931 = vmatprep.mubr.bf16.mxu0 %v589
    %932 = vmatmul.mubr.bf16.gmra.mrb[0].mxu0 %v588
    %v933 = vpop.f32.mrb[0].mxu0
    %v934 = vadd.f32 %v673, %v933
    %v935 = vpop.f32.mrb[0].mxu0
    %v936 = vpop.f32.mrb[0].mxu0
    %v937 = vadd.f32 %v673, %v936
    %v938 = vpop.f32.mrb[0].mxu0
    %939 = vmatprep.mubr.bf16.mxu0 %v593
    %940 = vmatmul.mubr.bf16.gmra.mrb[0].mxu0 %v592
    %v941 = vpop.f32.mrb[0].mxu0
    %v942 = vadd.f32 %v673, %v941
    %v943 = vpop.f32.mrb[0].mxu0
    %v944 = vpop.f32.mrb[0].mxu0
    %v945 = vadd.f32 %v673, %v944
    %v946 = vpop.f32.mrb[0].mxu0
    %947 = vmatprep.mubr.bf16.mxu0 %v597
    %948 = vmatmul.mubr.bf16.gmra.mrb[0].mxu0 %v596
    %v949 = vpop.f32.mrb[0].mxu0
    %v950 = vadd.f32 %v673, %v949
    %v951 = vpop.f32.mrb[0].mxu0
    %v952 = vpop.f32.mrb[0].mxu0
    %v953 = vadd.f32 %v673, %v952
    %v954 = vpop.f32.mrb[0].mxu0
    %955 = vmatprep.mubr.bf16.mxu0 %v601
    %956 = vmatmul.mubr.bf16.gmra.mrb[0].mxu0 %v600
    %v957 = vpop.f32.mrb[0].mxu0
    %v958 = vadd.f32 %v673, %v957
    %v959 = vpop.f32.mrb[0].mxu0
    %v960 = vpop.f32.mrb[0].mxu0
    %v961 = vadd.f32 %v673, %v960
    %v962 = vpop.f32.mrb[0].mxu0
    %963 = vdwg.mxu0
    %964 = vmatprep.subr.bf16.mxu0 0
    %965 = vmatpush1.bf16.msra.mxu0 %v819
    %966 = vmatprep.subr.bf16.mxu0 0
    %967 = vmatpush1.bf16.msra.mxu0 %v820
    %968 = vmatprep.subr.bf16.mxu0 0
    %969 = vmatpush1.bf16.msra.mxu0 %v821
    %970 = vmatprep.subr.bf16.mxu0 0
    %971 = vmatpush1.bf16.msra.mxu0 %v822
    %972 = vmatprep.subr.bf16.mxu0 0
    %973 = vmatpush1.bf16.msra.mxu0 %v823
    %974 = vmatprep.subr.bf16.mxu0 0
    %975 = vmatpush1.bf16.msra.mxu0 %v824
    %976 = vmatprep.subr.bf16.mxu0 0
    %977 = vmatpush1.bf16.msra.mxu0 %v825
    %978 = vmatprep.subr.bf16.mxu0 0
    %979 = vmatpush1.bf16.msra.mxu0 %v826
    %980 = vmatprep.subr.bf16.mxu0 0
    %981 = vmatpush1.bf16.msra.mxu0 %v827
    %982 = vmatprep.subr.bf16.mxu0 0
    %983 = vmatpush1.bf16.msra.mxu0 %v828
    %984 = vmatprep.subr.bf16.mxu0 0
    %985 = vmatpush1.bf16.msra.mxu0 %v829
    %986 = vmatprep.subr.bf16.mxu0 0
    %987 = vmatpush1.bf16.msra.mxu0 %v830
    %988 = vmatprep.subr.bf16.mxu0 0
    %989 = vmatpush1.bf16.msra.mxu0 %v831
    %990 = vmatprep.subr.bf16.mxu0 0
    %991 = vmatpush1.bf16.msra.mxu0 %v832
    %992 = vmatprep.subr.bf16.mxu0 0
    %993 = vmatpush1.bf16.msra.mxu0 %v833
    %994 = vmatprep.subr.bf16.mxu0 0
    %995 = vmatpush1.bf16.msra.mxu0 %v834
    %996 = vmatprep.mubr.bf16.mxu0 %v575
    %997 = vmatmul.mubr.bf16.gmra.mrb[0].mxu0 %v574
    %v998 = vpop.f32.mrb[0].mxu0
    %v999 = vadd.f32 %v902, %v998
    %v1000 = vpop.f32.mrb[0].mxu0
    %v1001 = vpop.f32.mrb[0].mxu0
    %v1002 = vadd.f32 %v905, %v1001
    %v1003 = vpop.f32.mrb[0].mxu0
    %1004 = vmatprep.mubr.bf16.mxu0 %v579
    %1005 = vmatmul.mubr.bf16.gmra.mrb[0].mxu0 %v578
    %v1006 = vpop.f32.mrb[0].mxu0
    %v1007 = vadd.f32 %v910, %v1006
    %v1008 = vpop.f32.mrb[0].mxu0
    %v1009 = vpop.f32.mrb[0].mxu0
    %v1010 = vadd.f32 %v913, %v1009
    %v1011 = vpop.f32.mrb[0].mxu0
    %1012 = vmatprep.mubr.bf16.mxu0 %v583
    %1013 = vmatmul.mubr.bf16.gmra.mrb[0].mxu0 %v582
    %v1014 = vpop.f32.mrb[0].mxu0
    %v1015 = vadd.f32 %v918, %v1014
    %v1016 = vpop.f32.mrb[0].mxu0
    %v1017 = vpop.f32.mrb[0].mxu0
    %v1018 = vadd.f32 %v921, %v1017
    %v1019 = vpop.f32.mrb[0].mxu0
    %1020 = vmatprep.mubr.bf16.mxu0 %v587
    %1021 = vmatmul.mubr.bf16.gmra.mrb[0].mxu0 %v586
    %v1022 = vpop.f32.mrb[0].mxu0
    %v1023 = vadd.f32 %v926, %v1022
    %v1024 = vpop.f32.mrb[0].mxu0
    %v1025 = vpop.f32.mrb[0].mxu0
    %v1026 = vadd.f32 %v929, %v1025
    %v1027 = vpop.f32.mrb[0].mxu0
    %1028 = vmatprep.mubr.bf16.mxu0 %v591
    %1029 = vmatmul.mubr.bf16.gmra.mrb[0].mxu0 %v590
    %v1030 = vpop.f32.mrb[0].mxu0
    %v1031 = vadd.f32 %v934, %v1030
    %v1032 = vpop.f32.mrb[0].mxu0
    %v1033 = vpop.f32.mrb[0].mxu0
    %v1034 = vadd.f32 %v937, %v1033
    %v1035 = vpop.f32.mrb[0].mxu0
    %1036 = vmatprep.mubr.bf16.mxu0 %v595
    %1037 = vmatmul.mubr.bf16.gmra.mrb[0].mxu0 %v594
    %v1038 = vpop.f32.mrb[0].mxu0
    %v1039 = vadd.f32 %v942, %v1038
    %v1040 = vpop.f32.mrb[0].mxu0
    %v1041 = vpop.f32.mrb[0].mxu0
    %v1042 = vadd.f32 %v945, %v1041
    %v1043 = vpop.f32.mrb[0].mxu0
    %1044 = vmatprep.mubr.bf16.mxu0 %v599
    %1045 = vmatmul.mubr.bf16.gmra.mrb[0].mxu0 %v598
    %v1046 = vpop.f32.mrb[0].mxu0
    %v1047 = vadd.f32 %v950, %v1046
    %v1048 = vpop.f32.mrb[0].mxu0
    %v1049 = vpop.f32.mrb[0].mxu0
    %v1050 = vadd.f32 %v953, %v1049
    %v1051 = vpop.f32.mrb[0].mxu0
    %1052 = vmatprep.mubr.bf16.mxu0 %v603
    %1053 = vmatmul.mubr.bf16.gmra.mrb[0].mxu0 %v602
    %v1054 = vpop.f32.mrb[0].mxu0
    %v1055 = vadd.f32 %v958, %v1054
    %v1056 = vpop.f32.mrb[0].mxu0
    %v1057 = vpop.f32.mrb[0].mxu0
    %v1058 = vadd.f32 %v961, %v1057
    %v1059 = vpop.f32.mrb[0].mxu0
    %1060 = vdwg.mxu0
    %v1061 = vld [vmem:[%s5] sm:$0xf]
    %v1062 = vld [vmem:[%s5 + $0x4] sm:$0xf]
    %v1063 = vld [vmem:[%s5 + $0x8] sm:$0xf]
    %v1064 = vld [vmem:[%s5 + $0xc] sm:$0xf]
    %v1065 = vld [vmem:[%s5 + $0x10] sm:$0xf]
    %v1066 = vld [vmem:[%s5 + $0x14] sm:$0xf]
    %v1067 = vld [vmem:[%s5 + $0x18] sm:$0xf]
    %v1068 = vld [vmem:[%s5 + $0x1c] sm:$0xf]
    %v1069 = vld [vmem:[%s5 + $0x20] sm:$0xf]
    %v1070 = vld [vmem:[%s5 + $0x24] sm:$0xf]
    %v1071 = vld [vmem:[%s5 + $0x28] sm:$0xf]
    %v1072 = vld [vmem:[%s5 + $0x2c] sm:$0xf]
    %v1073 = vld [vmem:[%s5 + $0x30] sm:$0xf]
    %v1074 = vld [vmem:[%s5 + $0x34] sm:$0xf]
    %v1075 = vld [vmem:[%s5 + $0x38] sm:$0xf]
    %v1076 = vld [vmem:[%s5 + $0x3c] sm:$0xf]
    %v1077 = vld [vmem:[%s5 + $0x40] sm:$0xf]
    %v1078 = vld [vmem:[%s5 + $0x44] sm:$0xf]
    %v1079 = vld [vmem:[%s5 + $0x48] sm:$0xf]
    %v1080 = vld [vmem:[%s5 + $0x4c] sm:$0xf]
    %v1081 = vld [vmem:[%s5 + $0x50] sm:$0xf]
    %v1082 = vld [vmem:[%s5 + $0x54] sm:$0xf]
    %v1083 = vld [vmem:[%s5 + $0x58] sm:$0xf]
    %v1084 = vld [vmem:[%s5 + $0x5c] sm:$0xf]
    %v1085 = vld [vmem:[%s5 + $0x60] sm:$0xf]
    %v1086 = vld [vmem:[%s5 + $0x64] sm:$0xf]
    %v1087 = vld [vmem:[%s5 + $0x68] sm:$0xf]
    %v1088 = vld [vmem:[%s5 + $0x6c] sm:$0xf]
    %v1089 = vld [vmem:[%s5 + $0x70] sm:$0xf]
    %v1090 = vld [vmem:[%s5 + $0x74] sm:$0xf]
    %v1091 = vld [vmem:[%s5 + $0x78] sm:$0xf]
    %v1092 = vld [vmem:[%s5 + $0x7c] sm:$0xf]
    %v1093 = vld [vmem:[%s5 + $0x80] sm:$0xf]
    %v1094 = vld [vmem:[%s5 + $0x84] sm:$0xf]
    %v1095 = vld [vmem:[%s5 + $0x88] sm:$0xf]
    %v1096 = vld [vmem:[%s5 + $0x8c] sm:$0xf]
    %v1097 = vld [vmem:[%s5 + $0x90] sm:$0xf]
    %v1098 = vld [vmem:[%s5 + $0x94] sm:$0xf]
    %v1099 = vld [vmem:[%s5 + $0x98] sm:$0xf]
    %v1100 = vld [vmem:[%s5 + $0x9c] sm:$0xf]
    %v1101 = vld [vmem:[%s5 + $0xa0] sm:$0xf]
    %v1102 = vld [vmem:[%s5 + $0xa4] sm:$0xf]
    %v1103 = vld [vmem:[%s5 + $0xa8] sm:$0xf]
    %v1104 = vld [vmem:[%s5 + $0xac] sm:$0xf]
    %v1105 = vld [vmem:[%s5 + $0xb0] sm:$0xf]
    %v1106 = vld [vmem:[%s5 + $0xb4] sm:$0xf]
    %v1107 = vld [vmem:[%s5 + $0xb8] sm:$0xf]
    %v1108 = vld [vmem:[%s5 + $0xbc] sm:$0xf]
    %v1109 = vld [vmem:[%s5 + $0xc0] sm:$0xf]
    %v1110 = vld [vmem:[%s5 + $0xc4] sm:$0xf]
    %v1111 = vld [vmem:[%s5 + $0xc8] sm:$0xf]
    %v1112 = vld [vmem:[%s5 + $0xcc] sm:$0xf]
    %v1113 = vld [vmem:[%s5 + $0xd0] sm:$0xf]
    %v1114 = vld [vmem:[%s5 + $0xd4] sm:$0xf]
    %v1115 = vld [vmem:[%s5 + $0xd8] sm:$0xf]
    %v1116 = vld [vmem:[%s5 + $0xdc] sm:$0xf]
    %v1117 = vld [vmem:[%s5 + $0xe0] sm:$0xf]
    %v1118 = vld [vmem:[%s5 + $0xe4] sm:$0xf]
    %v1119 = vld [vmem:[%s5 + $0xe8] sm:$0xf]
    %v1120 = vld [vmem:[%s5 + $0xec] sm:$0xf]
    %v1121 = vld [vmem:[%s5 + $0xf0] sm:$0xf]
    %v1122 = vld [vmem:[%s5 + $0xf4] sm:$0xf]
    %v1123 = vld [vmem:[%s5 + $0xf8] sm:$0xf]
    %v1124 = vld [vmem:[%s5 + $0xfc] sm:$0xf]
    %v1125 = vld [vmem:[%s6] sm:$0x1]
    %v1127 = vlaneseq
    %v1128 = vshrl.u32 %v1127, 7
    %v1129 = vsub.s32 0, %v1128
    %v1130 = vrot.slane %v1125, %v1129
    %v1196 = vunpack.c.l.b16 %v1061
    %v1197 = vunpack.c.l.b16 %v1062
    %v1198 = vunpack.c.l.b16 %v1063
    %v1199 = vunpack.c.l.b16 %v1064
    %v1200 = vunpack.c.l.b16 %v1065
    %v1201 = vunpack.c.l.b16 %v1066
    %v1202 = vunpack.c.l.b16 %v1067
    %v1203 = vunpack.c.l.b16 %v1068
    %v1204 = vunpack.c.l.b16 %v1069
    %v1205 = vunpack.c.l.b16 %v1070
    %v1206 = vunpack.c.l.b16 %v1071
    %v1207 = vunpack.c.l.b16 %v1072
    %v1208 = vunpack.c.l.b16 %v1073
    %v1209 = vunpack.c.l.b16 %v1074
    %v1210 = vunpack.c.l.b16 %v1075
    %v1211 = vunpack.c.l.b16 %v1076
    %v1212 = vunpack.c.l.b16 %v1077
    %v1213 = vunpack.c.l.b16 %v1078
    %v1214 = vunpack.c.l.b16 %v1079
    %v1215 = vunpack.c.l.b16 %v1080
    %v1216 = vunpack.c.l.b16 %v1081
    %v1217 = vunpack.c.l.b16 %v1082
    %v1218 = vunpack.c.l.b16 %v1083
    %v1219 = vunpack.c.l.b16 %v1084
    %v1220 = vunpack.c.l.b16 %v1085
    %v1221 = vunpack.c.l.b16 %v1086
    %v1222 = vunpack.c.l.b16 %v1087
    %v1223 = vunpack.c.l.b16 %v1088
    %v1224 = vunpack.c.l.b16 %v1089
    %v1225 = vunpack.c.l.b16 %v1090
    %v1226 = vunpack.c.l.b16 %v1091
    %v1227 = vunpack.c.l.b16 %v1092
    %v1228 = vunpack.c.l.b16 %v1093
    %v1229 = vunpack.c.l.b16 %v1094
    %v1230 = vunpack.c.l.b16 %v1095
    %v1231 = vunpack.c.l.b16 %v1096
    %v1232 = vunpack.c.l.b16 %v1097
    %v1233 = vunpack.c.l.b16 %v1098
    %v1234 = vunpack.c.l.b16 %v1099
    %v1235 = vunpack.c.l.b16 %v1100
    %v1236 = vunpack.c.l.b16 %v1101
    %v1237 = vunpack.c.l.b16 %v1102
    %v1238 = vunpack.c.l.b16 %v1103
    %v1239 = vunpack.c.l.b16 %v1104
    %v1240 = vunpack.c.l.b16 %v1105
    %v1241 = vunpack.c.l.b16 %v1106
    %v1242 = vunpack.c.l.b16 %v1107
    %v1243 = vunpack.c.l.b16 %v1108
    %v1244 = vunpack.c.l.b16 %v1109
    %v1245 = vunpack.c.l.b16 %v1110
    %v1246 = vunpack.c.l.b16 %v1111
    %v1247 = vunpack.c.l.b16 %v1112
    %v1248 = vunpack.c.l.b16 %v1113
    %v1249 = vunpack.c.l.b16 %v1114
    %v1250 = vunpack.c.l.b16 %v1115
    %v1251 = vunpack.c.l.b16 %v1116
    %v1252 = vunpack.c.l.b16 %v1117
    %v1253 = vunpack.c.l.b16 %v1118
    %v1254 = vunpack.c.l.b16 %v1119
    %v1255 = vunpack.c.l.b16 %v1120
    %v1256 = vunpack.c.l.b16 %v1121
    %v1257 = vunpack.c.l.b16 %v1122
    %v1258 = vunpack.c.l.b16 %v1123
    %v1259 = vunpack.c.l.b16 %v1124
    %v1260 = vpack.c.b16 %v1197, %v1196
    %v1261 = vpack.c.b16 %v1199, %v1198
    %v1262 = vpack.c.b16 %v1201, %v1200
    %v1263 = vpack.c.b16 %v1203, %v1202
    %v1264 = vpack.c.b16 %v1205, %v1204
    %v1265 = vpack.c.b16 %v1207, %v1206
    %v1266 = vpack.c.b16 %v1209, %v1208
    %v1267 = vpack.c.b16 %v1211, %v1210
    %v1268 = vpack.c.b16 %v1213, %v1212
    %v1269 = vpack.c.b16 %v1215, %v1214
    %v1270 = vpack.c.b16 %v1217, %v1216
    %v1271 = vpack.c.b16 %v1219, %v1218
    %v1272 = vpack.c.b16 %v1221, %v1220
    %v1273 = vpack.c.b16 %v1223, %v1222
    %v1274 = vpack.c.b16 %v1225, %v1224
    %v1275 = vpack.c.b16 %v1227, %v1226
    %v1276 = vpack.c.b16 %v1229, %v1228
    %v1277 = vpack.c.b16 %v1231, %v1230
    %v1278 = vpack.c.b16 %v1233, %v1232
    %v1279 = vpack.c.b16 %v1235, %v1234
    %v1280 = vpack.c.b16 %v1237, %v1236
    %v1281 = vpack.c.b16 %v1239, %v1238
    %v1282 = vpack.c.b16 %v1241, %v1240
    %v1283 = vpack.c.b16 %v1243, %v1242
    %v1284 = vpack.c.b16 %v1245, %v1244
    %v1285 = vpack.c.b16 %v1247, %v1246
    %v1286 = vpack.c.b16 %v1249, %v1248
    %v1287 = vpack.c.b16 %v1251, %v1250
    %v1288 = vpack.c.b16 %v1253, %v1252
    %v1289 = vpack.c.b16 %v1255, %v1254
    %v1290 = vpack.c.b16 %v1257, %v1256
    %v1291 = vpack.c.b16 %v1259, %v1258
    %1324 = vmatprep.subr.bf16.mxu0 0
    %1325 = vmatpush1.bf16.msra.mxu0 %v1260
    %1326 = vmatprep.subr.bf16.mxu0 0
    %1327 = vmatpush1.bf16.msra.mxu0 %v1261
    %1328 = vmatprep.subr.bf16.mxu0 0
    %1329 = vmatpush1.bf16.msra.mxu0 %v1262
    %1330 = vmatprep.subr.bf16.mxu0 0
    %1331 = vmatpush1.bf16.msra.mxu0 %v1263
    %1332 = vmatprep.subr.bf16.mxu0 0
    %1333 = vmatpush1.bf16.msra.mxu0 %v1264
    %1334 = vmatprep.subr.bf16.mxu0 0
    %1335 = vmatpush1.bf16.msra.mxu0 %v1265
    %1336 = vmatprep.subr.bf16.mxu0 0
    %1337 = vmatpush1.bf16.msra.mxu0 %v1266
    %1338 = vmatprep.subr.bf16.mxu0 0
    %1339 = vmatpush1.bf16.msra.mxu0 %v1267
    %1340 = vmatprep.subr.bf16.mxu0 0
    %1341 = vmatpush1.bf16.msra.mxu0 %v1268
    %1342 = vmatprep.subr.bf16.mxu0 0
    %1343 = vmatpush1.bf16.msra.mxu0 %v1269
    %1344 = vmatprep.subr.bf16.mxu0 0
    %1345 = vmatpush1.bf16.msra.mxu0 %v1270
    %1346 = vmatprep.subr.bf16.mxu0 0
    %1347 = vmatpush1.bf16.msra.mxu0 %v1271
    %1348 = vmatprep.subr.bf16.mxu0 0
    %1349 = vmatpush1.bf16.msra.mxu0 %v1272
    %1350 = vmatprep.subr.bf16.mxu0 0
    %1351 = vmatpush1.bf16.msra.mxu0 %v1273
    %1352 = vmatprep.subr.bf16.mxu0 0
    %1353 = vmatpush1.bf16.msra.mxu0 %v1274
    %1354 = vmatprep.subr.bf16.mxu0 0
    %1355 = vmatpush1.bf16.msra.mxu0 %v1275
    %1356 = vmatprep.mubr.bf16.mxu0 %v573
    %1357 = vmatmul.mubr.bf16.gmra.mrb[0].mxu0 %v572
    %v1358 = vpop.f32.mrb[0].mxu0
    %v1359 = vadd.f32 %v1130, %v1358
    %v1360 = vpop.f32.mrb[0].mxu0
    %v1361 = vpop.f32.mrb[0].mxu0
    %v1362 = vadd.f32 %v1130, %v1361
    %v1363 = vpop.f32.mrb[0].mxu0
    %1364 = vmatprep.mubr.bf16.mxu0 %v577
    %1365 = vmatmul.mubr.bf16.gmra.mrb[0].mxu0 %v576
    %v1366 = vpop.f32.mrb[0].mxu0
    %v1367 = vadd.f32 %v1130, %v1366
    %v1368 = vpop.f32.mrb[0].mxu0
    %v1369 = vpop.f32.mrb[0].mxu0
    %v1370 = vadd.f32 %v1130, %v1369
    %v1371 = vpop.f32.mrb[0].mxu0
    %1372 = vmatprep.mubr.bf16.mxu0 %v581
    %1373 = vmatmul.mubr.bf16.gmra.mrb[0].mxu0 %v580
    %v1374 = vpop.f32.mrb[0].mxu0
    %v1375 = vadd.f32 %v1130, %v1374
    %v1376 = vpop.f32.mrb[0].mxu0
    %v1377 = vpop.f32.mrb[0].mxu0
    %v1378 = vadd.f32 %v1130, %v1377
    %v1379 = vpop.f32.mrb[0].mxu0
    %1380 = vmatprep.mubr.bf16.mxu0 %v585
    %1381 = vmatmul.mubr.bf16.gmra.mrb[0].mxu0 %v584
    %v1382 = vpop.f32.mrb[0].mxu0
    %v1383 = vadd.f32 %v1130, %v1382
    %v1384 = vpop.f32.mrb[0].mxu0
    %v1385 = vpop.f32.mrb[0].mxu0
    %v1386 = vadd.f32 %v1130, %v1385
    %v1387 = vpop.f32.mrb[0].mxu0
    %1388 = vmatprep.mubr.bf16.mxu0 %v589
    %1389 = vmatmul.mubr.bf16.gmra.mrb[0].mxu0 %v588
    %v1390 = vpop.f32.mrb[0].mxu0
    %v1391 = vadd.f32 %v1130, %v1390
    %v1392 = vpop.f32.mrb[0].mxu0
    %v1393 = vpop.f32.mrb[0].mxu0
    %v1394 = vadd.f32 %v1130, %v1393
    %v1395 = vpop.f32.mrb[0].mxu0
    %1396 = vmatprep.mubr.bf16.mxu0 %v593
    %1397 = vmatmul.mubr.bf16.gmra.mrb[0].mxu0 %v592
    %v1398 = vpop.f32.mrb[0].mxu0
    %v1399 = vadd.f32 %v1130, %v1398
    %v1400 = vpop.f32.mrb[0].mxu0
    %v1401 = vpop.f32.mrb[0].mxu0
    %v1402 = vadd.f32 %v1130, %v1401
    %v1403 = vpop.f32.mrb[0].mxu0
    %1404 = vmatprep.mubr.bf16.mxu0 %v597
    %1405 = vmatmul.mubr.bf16.gmra.mrb[0].mxu0 %v596
    %v1406 = vpop.f32.mrb[0].mxu0
    %v1407 = vadd.f32 %v1130, %v1406
    %v1408 = vpop.f32.mrb[0].mxu0
    %v1409 = vpop.f32.mrb[0].mxu0
    %v1410 = vadd.f32 %v1130, %v1409
    %v1411 = vpop.f32.mrb[0].mxu0
    %1412 = vmatprep.mubr.bf16.mxu0 %v601
    %1413 = vmatmul.mubr.bf16.gmra.mrb[0].mxu0 %v600
    %v1414 = vpop.f32.mrb[0].mxu0
    %v1415 = vadd.f32 %v1130, %v1414
    %v1416 = vpop.f32.mrb[0].mxu0
    %v1417 = vpop.f32.mrb[0].mxu0
    %v1418 = vadd.f32 %v1130, %v1417
    %v1419 = vpop.f32.mrb[0].mxu0
    %1420 = vdwg.mxu0
    %1421 = vmatprep.subr.bf16.mxu0 0
    %1422 = vmatpush1.bf16.msra.mxu0 %v1276
    %1423 = vmatprep.subr.bf16.mxu0 0
    %1424 = vmatpush1.bf16.msra.mxu0 %v1277
    %1425 = vmatprep.subr.bf16.mxu0 0
    %1426 = vmatpush1.bf16.msra.mxu0 %v1278
    %1427 = vmatprep.subr.bf16.mxu0 0
    %1428 = vmatpush1.bf16.msra.mxu0 %v1279
    %1429 = vmatprep.subr.bf16.mxu0 0
    %1430 = vmatpush1.bf16.msra.mxu0 %v1280
    %1431 = vmatprep.subr.bf16.mxu0 0
    %1432 = vmatpush1.bf16.msra.mxu0 %v1281
    %1433 = vmatprep.subr.bf16.mxu0 0
    %1434 = vmatpush1.bf16.msra.mxu0 %v1282
    %1435 = vmatprep.subr.bf16.mxu0 0
    %1436 = vmatpush1.bf16.msra.mxu0 %v1283
    %1437 = vmatprep.subr.bf16.mxu0 0
    %1438 = vmatpush1.bf16.msra.mxu0 %v1284
    %1439 = vmatprep.subr.bf16.mxu0 0
    %1440 = vmatpush1.bf16.msra.mxu0 %v1285
    %1441 = vmatprep.subr.bf16.mxu0 0
    %1442 = vmatpush1.bf16.msra.mxu0 %v1286
    %1443 = vmatprep.subr.bf16.mxu0 0
    %1444 = vmatpush1.bf16.msra.mxu0 %v1287
    %1445 = vmatprep.subr.bf16.mxu0 0
    %1446 = vmatpush1.bf16.msra.mxu0 %v1288
    %1447 = vmatprep.subr.bf16.mxu0 0
    %1448 = vmatpush1.bf16.msra.mxu0 %v1289
    %1449 = vmatprep.subr.bf16.mxu0 0
    %1450 = vmatpush1.bf16.msra.mxu0 %v1290
    %1451 = vmatprep.subr.bf16.mxu0 0
    %1452 = vmatpush1.bf16.msra.mxu0 %v1291
    %1453 = vmatprep.mubr.bf16.mxu0 %v575
    %1454 = vmatmul.mubr.bf16.gmra.mrb[0].mxu0 %v574
    %v1455 = vpop.f32.mrb[0].mxu0
    %v1456 = vadd.f32 %v1359, %v1455
    %v1457 = vpop.f32.mrb[0].mxu0
    %v1458 = vpop.f32.mrb[0].mxu0
    %v1459 = vadd.f32 %v1362, %v1458
    %v1460 = vpop.f32.mrb[0].mxu0
    %1461 = vmatprep.mubr.bf16.mxu0 %v579
    %1462 = vmatmul.mubr.bf16.gmra.mrb[0].mxu0 %v578
    %v1463 = vpop.f32.mrb[0].mxu0
    %v1464 = vadd.f32 %v1367, %v1463
    %v1465 = vpop.f32.mrb[0].mxu0
    %v1466 = vpop.f32.mrb[0].mxu0
    %v1467 = vadd.f32 %v1370, %v1466
    %v1468 = vpop.f32.mrb[0].mxu0
    %1469 = vmatprep.mubr.bf16.mxu0 %v583
    %1470 = vmatmul.mubr.bf16.gmra.mrb[0].mxu0 %v582
    %v1471 = vpop.f32.mrb[0].mxu0
    %v1472 = vadd.f32 %v1375, %v1471
    %v1473 = vpop.f32.mrb[0].mxu0
    %v1474 = vpop.f32.mrb[0].mxu0
    %v1475 = vadd.f32 %v1378, %v1474
    %v1476 = vpop.f32.mrb[0].mxu0
    %1477 = vmatprep.mubr.bf16.mxu0 %v587
    %1478 = vmatmul.mubr.bf16.gmra.mrb[0].mxu0 %v586
    %v1479 = vpop.f32.mrb[0].mxu0
    %v1480 = vadd.f32 %v1383, %v1479
    %v1481 = vpop.f32.mrb[0].mxu0
    %v1482 = vpop.f32.mrb[0].mxu0
    %v1483 = vadd.f32 %v1386, %v1482
    %v1484 = vpop.f32.mrb[0].mxu0
    %1485 = vmatprep.mubr.bf16.mxu0 %v591
    %1486 = vmatmul.mubr.bf16.gmra.mrb[0].mxu0 %v590
    %v1487 = vpop.f32.mrb[0].mxu0
    %v1488 = vadd.f32 %v1391, %v1487
    %v1489 = vpop.f32.mrb[0].mxu0
    %v1490 = vpop.f32.mrb[0].mxu0
    %v1491 = vadd.f32 %v1394, %v1490
    %v1492 = vpop.f32.mrb[0].mxu0
    %1493 = vmatprep.mubr.bf16.mxu0 %v595
    %1494 = vmatmul.mubr.bf16.gmra.mrb[0].mxu0 %v594
    %v1495 = vpop.f32.mrb[0].mxu0
    %v1496 = vadd.f32 %v1399, %v1495
    %v1497 = vpop.f32.mrb[0].mxu0
    %v1498 = vpop.f32.mrb[0].mxu0
    %v1499 = vadd.f32 %v1402, %v1498
    %v1500 = vpop.f32.mrb[0].mxu0
    %1501 = vmatprep.mubr.bf16.mxu0 %v599
    %1502 = vmatmul.mubr.bf16.gmra.mrb[0].mxu0 %v598
    %v1503 = vpop.f32.mrb[0].mxu0
    %v1504 = vadd.f32 %v1407, %v1503
    %v1505 = vpop.f32.mrb[0].mxu0
    %v1506 = vpop.f32.mrb[0].mxu0
    %v1507 = vadd.f32 %v1410, %v1506
    %v1508 = vpop.f32.mrb[0].mxu0
    %1509 = vmatprep.mubr.bf16.mxu0 %v603
    %1510 = vmatmul.mubr.bf16.gmra.mrb[0].mxu0 %v602
    %v1511 = vpop.f32.mrb[0].mxu0
    %v1512 = vadd.f32 %v1415, %v1511
    %v1513 = vpop.f32.mrb[0].mxu0
    %v1514 = vpop.f32.mrb[0].mxu0
    %v1515 = vadd.f32 %v1418, %v1514
    %v1516 = vpop.f32.mrb[0].mxu0
    %1517 = vdwg.mxu0
    %v1518 = vmul.f32 %v1456, 1.442695
    %v1519 = vpow.pop %v1518
    %v1520 = vmul.f32 %v1459, 1.442695
    %v1521 = vpow.pop %v1520
    %v1522 = vmul.f32 %v1464, 1.442695
    %v1523 = vpow.pop %v1522
    %v1524 = vmul.f32 %v1467, 1.442695
    %v1525 = vpow.pop %v1524
    %v1526 = vmul.f32 %v1472, 1.442695
    %v1527 = vpow.pop %v1526
    %v1528 = vmul.f32 %v1475, 1.442695
    %v1529 = vpow.pop %v1528
    %v1530 = vmul.f32 %v1480, 1.442695
    %v1531 = vpow.pop %v1530
    %v1532 = vmul.f32 %v1483, 1.442695
    %v1533 = vpow.pop %v1532
    %v1534 = vmul.f32 %v1488, 1.442695
    %v1535 = vpow.pop %v1534
    %v1536 = vmul.f32 %v1491, 1.442695
    %v1537 = vpow.pop %v1536
    %v1538 = vmul.f32 %v1496, 1.442695
    %v1539 = vpow.pop %v1538
    %v1540 = vmul.f32 %v1499, 1.442695
    %v1541 = vpow.pop %v1540
    %v1542 = vmul.f32 %v1504, 1.442695
    %v1543 = vpow.pop %v1542
    %v1544 = vmul.f32 %v1507, 1.442695
    %v1545 = vpow.pop %v1544
    %v1546 = vmul.f32 %v1512, 1.442695
    %v1547 = vpow.pop %v1546
    %v1548 = vmul.f32 %v1515, 1.442695
    %v1549 = vpow.pop %v1548
    %v1550 = vmul.f32 %v29, %v1519
    %v1551 = vmul.f32 %v31, %v1521
    %v1552 = vmul.f32 %v33, %v1523
    %v1553 = vmul.f32 %v35, %v1525
    %v1554 = vmul.f32 %v37, %v1527
    %v1555 = vmul.f32 %v39, %v1529
    %v1556 = vmul.f32 %v41, %v1531
    %v1557 = vmul.f32 %v43, %v1533
    %v1558 = vmul.f32 %v45, %v1535
    %v1559 = vmul.f32 %v47, %v1537
    %v1560 = vmul.f32 %v49, %v1539
    %v1561 = vmul.f32 %v51, %v1541
    %v1562 = vmul.f32 %v53, %v1543
    %v1563 = vmul.f32 %v55, %v1545
    %v1564 = vmul.f32 %v57, %v1547
    %v1565 = vmul.f32 %v59, %v1549
    %v1566 = vadd.f32 %v1550, %v999
    %v1567 = vadd.f32 %v1551, %v1002
    %v1568 = vadd.f32 %v1552, %v1007
    %v1569 = vadd.f32 %v1553, %v1010
    %v1570 = vadd.f32 %v1554, %v1015
    %v1571 = vadd.f32 %v1555, %v1018
    %v1572 = vadd.f32 %v1556, %v1023
    %v1573 = vadd.f32 %v1557, %v1026
    %v1574 = vadd.f32 %v1558, %v1031
    %v1575 = vadd.f32 %v1559, %v1034
    %v1576 = vadd.f32 %v1560, %v1039
    %v1577 = vadd.f32 %v1561, %v1042
    %v1578 = vadd.f32 %v1562, %v1047
    %v1579 = vadd.f32 %v1563, %v1050
    %v1580 = vadd.f32 %v1564, %v1055
    %v1581 = vadd.f32 %v1565, %v1058
    %1582 = vst [vmem:[#allocation2] sm:$0xff] %v28
    %1583 = vst [vmem:[#allocation2 + $0x10] sm:$0xff] %v30
    %1584 = vst [vmem:[#allocation2 + $0x20] sm:$0xff] %v32
    %1585 = vst [vmem:[#allocation2 + $0x30] sm:$0xff] %v34
    %1586 = vst [vmem:[#allocation2 + $0x40] sm:$0xff] %v36
    %1587 = vst [vmem:[#allocation2 + $0x50] sm:$0xff] %v38
    %1588 = vst [vmem:[#allocation2 + $0x60] sm:$0xff] %v40
    %1589 = vst [vmem:[#allocation2 + $0x70] sm:$0xff] %v42
    %1590 = vst [vmem:[#allocation2 + $0x80] sm:$0xff] %v44
    %1591 = vst [vmem:[#allocation2 + $0x90] sm:$0xff] %v46
    %1592 = vst [vmem:[#allocation2 + $0xa0] sm:$0xff] %v48
    %1593 = vst [vmem:[#allocation2 + $0xb0] sm:$0xff] %v50
    %1594 = vst [vmem:[#allocation2 + $0xc0] sm:$0xff] %v52
    %1595 = vst [vmem:[#allocation2 + $0xd0] sm:$0xff] %v54
    %1596 = vst [vmem:[#allocation2 + $0xe0] sm:$0xff] %v56
    %1597 = vst [vmem:[#allocation2 + $0xf0] sm:$0xff] %v58
    %1598 = vst [vmem:[#allocation2 + $0x8] sm:$0xff] %v1566
    %1599 = vst [vmem:[#allocation2 + $0x18] sm:$0xff] %v1567
    %1600 = vst [vmem:[#allocation2 + $0x28] sm:$0xff] %v1568
    %1601 = vst [vmem:[#allocation2 + $0x38] sm:$0xff] %v1569
    %1602 = vst [vmem:[#allocation2 + $0x48] sm:$0xff] %v1570
    %1603 = vst [vmem:[#allocation2 + $0x58] sm:$0xff] %v1571
    %1604 = vst [vmem:[#allocation2 + $0x68] sm:$0xff] %v1572
    %1605 = vst [vmem:[#allocation2 + $0x78] sm:$0xff] %v1573
    %1606 = vst [vmem:[#allocation2 + $0x88] sm:$0xff] %v1574
    %1607 = vst [vmem:[#allocation2 + $0x98] sm:$0xff] %v1575
    %1608 = vst [vmem:[#allocation2 + $0xa8] sm:$0xff] %v1576
    %1609 = vst [vmem:[#allocation2 + $0xb8] sm:$0xff] %v1577
    %1610 = vst [vmem:[#allocation2 + $0xc8] sm:$0xff] %v1578
    %1611 = vst [vmem:[#allocation2 + $0xd8] sm:$0xff] %v1579
    %1612 = vst [vmem:[#allocation2 + $0xe8] sm:$0xff] %v1580
    %1613 = vst [vmem:[#allocation2 + $0xf8] sm:$0xff] %v1581
    // Predicated region
    $region30: #{affine_coupling_forward.1} parent=1 // pred_check
      _
    $region31: #{affine_coupling_forward.1} parent=1 // pred_check_branch
      %1615 = sbr.rel (0) target = $region33
    $region32: #{affine_coupling_forward.1} parent=1 // pred_region
      %s1617 = ssub.s32 4096, 4096
      %1618 = vsyncadd [#allocation3], %s1617
      %s1619 = sshll.u32 [#allocation2], 4
      %s1620 = int_to_ptr.vmem [resolvable:$true] %s1619
      %1625 = dma.vmem_to_hbm [thread:$0]  %s1620, 4096, %s7, [#allocation3], 256, 256, 16
    $region33: #{affine_coupling_forward.1} parent=1 // pred_fallthru
      _
    // Predicated region
    $region34: #{affine_coupling_forward.1} parent=1 // pred_check
      _
    $region35: #{affine_coupling_forward.1} parent=1 // pred_check_branch
      %1627 = sbr.rel (0) target = $region37
    $region36: #{affine_coupling_forward.1} parent=1 // pred_region
      %1628 = dma.done [#allocation3], 4096
    $region37: #{affine_coupling_forward.1} parent=1 // pred_fallthru
      _
    %1629 = vsyncpa [#allocation3], 1

</llo_original>
